<compile_context>
chip_gen: v7x
topology: tpu7x:2x2x1
jax: 0.10.0
libtpu: 0.0.40
codegen_flags: <defaults>
</compile_context>

<pallas_src>
import jax
import jax.numpy as jnp
from jax.experimental import pallas as pl
from jax.experimental.pallas import tpu as pltpu

F_IN = 12              # input features
F_HID = 12             # hidden units
LANE = 128             # TPU lane width
TARGET_TILE_ROWS = 2048  # batch rows per grid step (multiple of 1024 = 8 sublanes * 128 lanes)


def fire_classifier_kernel(w1_ref, b1_ref, w2_ref, b2_ref, x_ref, out_ref):
    """One batch tile.

    w1_ref : (12, 12) SMEM, PyTorch (out, in) layout.
    b1_ref : (12,)    SMEM.
    w2_ref : (12,)    SMEM (output.weight flattened).
    b2_ref : (1,)     SMEM.
    x_ref  : (12, TG, 128) VMEM -- feature-major, batch on (sublane, lane).
    out_ref: (TG, 128) VMEM     -- lane-dense sigmoid output.
    """
    # Load each feature plane once; each is a dense (TG, 128) slab of batch rows.
    x_planes = [x_ref[k] for k in range(F_IN)]

    # Layer-2 accumulator seeded with its bias. The two layers are fused so only
    # one hidden slab is live at a time (low vreg pressure).
    y = jnp.full(out_ref.shape, b2_ref[0], dtype=jnp.float32)

    for j in range(F_HID):
        # Hidden unit j: b1[j] + sum_k W1[j, k] * x_k  (VPU broadcast MACs).
        h_j = jnp.full(out_ref.shape, b1_ref[j], dtype=jnp.float32)
        for k in range(F_IN):
            h_j = h_j + w1_ref[j, k] * x_planes[k]
        h_j = jnp.maximum(h_j, 0.0)           # ReLU
        y = y + w2_ref[j] * h_j               # layer-2 MAC

    out_ref[...] = jax.nn.sigmoid(y).astype(out_ref.dtype)


@jax.jit
def fire_classifier(x, w1, b1, w2, b2):
    """x: (B, 12) f32.  Weights in PyTorch layout:
       w1: (12, 12), b1: (12,), w2: (1, 12), b2: (1,)."""
    B, f = x.shape
    assert f == F_IN

    # --- host-side packing: put batch on (sublane, lane), feature-major ---------
    if B <= TARGET_TILE_ROWS:
        b_pad = pl.cdiv(B, LANE) * LANE          # single tile, minimal padding
        tile_rows = b_pad
    else:
        tile_rows = TARGET_TILE_ROWS
        b_pad = pl.cdiv(B, tile_rows) * tile_rows  # pad: last tile needs no masking

    g_total = b_pad // LANE        # total sublane-groups of 128 rows
    tg = tile_rows // LANE         # sublane-groups per tile (1 or multiple of 8)
    grid = (b_pad // tile_rows,)

    x_pad = jnp.pad(x.astype(jnp.float32), ((0, b_pad - B), (0, 0)))
    # (B_pad, 12) -> (12, B_pad) -> (12, G, 128): element (k, g, l) = row g*128 + l.
    x_packed = x_pad.T.reshape(F_IN, g_total, LANE)

    out = pl.pallas_call(
        fire_classifier_kernel,
        out_shape=jax.ShapeDtypeStruct((g_total, LANE), jnp.float32),
        grid=grid,
        in_specs=[
            pl.BlockSpec(memory_space=pltpu.MemorySpace.SMEM),    # w1 (resident)
            pl.BlockSpec(memory_space=pltpu.MemorySpace.SMEM),    # b1
            pl.BlockSpec(memory_space=pltpu.MemorySpace.SMEM),    # w2
            pl.BlockSpec(memory_space=pltpu.MemorySpace.SMEM),    # b2
            pl.BlockSpec((F_IN, tg, LANE), lambda i: (0, i, 0)),  # x batch tile
        ],
        out_specs=pl.BlockSpec((tg, LANE), lambda i: (i, 0)),     # lane-dense output tile
        compiler_params=pltpu.CompilerParams(
            dimension_semantics=("parallel",),   # batch tiles across both TCs on v7x
        ),
        cost_estimate=pl.CostEstimate(
            flops=2 * b_pad * (F_IN * F_HID + F_HID),
            transcendentals=b_pad,                    # one exp per row (sigmoid)
            bytes_accessed=b_pad * (F_IN * 4 + 4),    # 48 B read + 4 B write per row
        ),
    )(w1, b1, w2.reshape(F_HID), b2, x_packed)

    # (G, 128) -> (B_pad,) -> (B, 1); batch index is g*128 + l by construction.
    return out.reshape(b_pad)[:B].reshape(B, 1)


def init_params(key):
    # PyTorch nn.Linear layout: weight (out, in), bias (out,)
    k1, k2, k3, k4 = jax.random.split(key, 4)
    w1 = jax.random.normal(k1, (F_HID, F_IN), jnp.float32) * 0.3
    b1 = jax.random.normal(k2, (F_HID,), jnp.float32) * 0.3
    w2 = jax.random.normal(k3, (1, F_HID), jnp.float32) * 0.3
    b2 = jax.random.normal(k4, (1,), jnp.float32) * 0.3
    return w1, b1, w2, b2


def reference(x, w1, b1, w2, b2):
    h = jnp.maximum(x @ w1.T + b1, 0.0)
    return jax.nn.sigmoid(h @ w2.T + b2)


if __name__ == "__main__":
    key = jax.random.PRNGKey(0)
    kx, kp = jax.random.split(key)
    B = 8                                    # small batch for the smoke test
    x = jax.random.normal(kx, (B, F_IN), jnp.float32)
    w1, b1, w2, b2 = init_params(kp)

    out = fire_classifier(x, w1, b1, w2, b2)
    out = jax.block_until_ready(out)

    ref = reference(x, w1, b1, w2, b2)
    assert out.shape == (B, 1), out.shape
    assert jnp.allclose(out, ref, atol=1e-5, rtol=1e-5), float(jnp.max(jnp.abs(out - ref)))

    print("KERNEL_OK")
</pallas_src>

<mosaic_0001>
module attributes {stable_mosaic.version = 11 : i64} {
  func.func @fire_classifier_kernel(%arg0: i32, %arg1: memref<12x12xf32, #tpu.memory_space<smem>>, %arg2: memref<12xf32, #tpu.memory_space<smem>>, %arg3: memref<12xf32, #tpu.memory_space<smem>>, %arg4: memref<1xf32, #tpu.memory_space<smem>>, %arg5: memref<12x1x128xf32, #tpu.memory_space<vmem>>, %arg6: memref<1x128xf32, #tpu.memory_space<vmem>>) attributes {dimension_semantics = [#tpu.dimension_semantics<parallel>], iteration_bounds = array<i64: 1>, scalar_prefetch = 0 : i64, scratch_operands = 0 : i64, tpu.core_type = #tpu.core_type<tc>, window_params = [{transform_indices = @transform_0, window_bounds = array<i64: 12, 12>}, {transform_indices = @transform_1, window_bounds = array<i64: 12>}, {transform_indices = @transform_2, window_bounds = array<i64: 12>}, {transform_indices = @transform_3, window_bounds = array<i64: 1>}, {transform_indices = @transform_4, window_bounds = array<i64: 12, 1, 128>}, {transform_indices = @transform_5, window_bounds = array<i64: 1, 128>}]} {
    %c0 = arith.constant 0 : index
    %c0_0 = arith.constant 0 : index
    %c0_1 = arith.constant 0 : index
    %0 = vector.load %arg5[%c0, %c0_0, %c0_1] : memref<12x1x128xf32, #tpu.memory_space<vmem>>, vector<1x1x128xf32>
    %1 = vector.shape_cast %0 : vector<1x1x128xf32> to vector<1x128xf32>
    %c1 = arith.constant 1 : index
    %c0_2 = arith.constant 0 : index
    %c0_3 = arith.constant 0 : index
    %2 = vector.load %arg5[%c1, %c0_2, %c0_3] : memref<12x1x128xf32, #tpu.memory_space<vmem>>, vector<1x1x128xf32>
    %3 = vector.shape_cast %2 : vector<1x1x128xf32> to vector<1x128xf32>
    %c2 = arith.constant 2 : index
    %c0_4 = arith.constant 0 : index
    %c0_5 = arith.constant 0 : index
    %4 = vector.load %arg5[%c2, %c0_4, %c0_5] : memref<12x1x128xf32, #tpu.memory_space<vmem>>, vector<1x1x128xf32>
    %5 = vector.shape_cast %4 : vector<1x1x128xf32> to vector<1x128xf32>
    %c3 = arith.constant 3 : index
    %c0_6 = arith.constant 0 : index
    %c0_7 = arith.constant 0 : index
    %6 = vector.load %arg5[%c3, %c0_6, %c0_7] : memref<12x1x128xf32, #tpu.memory_space<vmem>>, vector<1x1x128xf32>
    %7 = vector.shape_cast %6 : vector<1x1x128xf32> to vector<1x128xf32>
    %c4 = arith.constant 4 : index
    %c0_8 = arith.constant 0 : index
    %c0_9 = arith.constant 0 : index
    %8 = vector.load %arg5[%c4, %c0_8, %c0_9] : memref<12x1x128xf32, #tpu.memory_space<vmem>>, vector<1x1x128xf32>
    %9 = vector.shape_cast %8 : vector<1x1x128xf32> to vector<1x128xf32>
    %c5 = arith.constant 5 : index
    %c0_10 = arith.constant 0 : index
    %c0_11 = arith.constant 0 : index
    %10 = vector.load %arg5[%c5, %c0_10, %c0_11] : memref<12x1x128xf32, #tpu.memory_space<vmem>>, vector<1x1x128xf32>
    %11 = vector.shape_cast %10 : vector<1x1x128xf32> to vector<1x128xf32>
    %c6 = arith.constant 6 : index
    %c0_12 = arith.constant 0 : index
    %c0_13 = arith.constant 0 : index
    %12 = vector.load %arg5[%c6, %c0_12, %c0_13] : memref<12x1x128xf32, #tpu.memory_space<vmem>>, vector<1x1x128xf32>
    %13 = vector.shape_cast %12 : vector<1x1x128xf32> to vector<1x128xf32>
    %c7 = arith.constant 7 : index
    %c0_14 = arith.constant 0 : index
    %c0_15 = arith.constant 0 : index
    %14 = vector.load %arg5[%c7, %c0_14, %c0_15] : memref<12x1x128xf32, #tpu.memory_space<vmem>>, vector<1x1x128xf32>
    %15 = vector.shape_cast %14 : vector<1x1x128xf32> to vector<1x128xf32>
    %c8 = arith.constant 8 : index
    %c0_16 = arith.constant 0 : index
    %c0_17 = arith.constant 0 : index
    %16 = vector.load %arg5[%c8, %c0_16, %c0_17] : memref<12x1x128xf32, #tpu.memory_space<vmem>>, vector<1x1x128xf32>
    %17 = vector.shape_cast %16 : vector<1x1x128xf32> to vector<1x128xf32>
    %c9 = arith.constant 9 : index
    %c0_18 = arith.constant 0 : index
    %c0_19 = arith.constant 0 : index
    %18 = vector.load %arg5[%c9, %c0_18, %c0_19] : memref<12x1x128xf32, #tpu.memory_space<vmem>>, vector<1x1x128xf32>
    %19 = vector.shape_cast %18 : vector<1x1x128xf32> to vector<1x128xf32>
    %c10 = arith.constant 10 : index
    %c0_20 = arith.constant 0 : index
    %c0_21 = arith.constant 0 : index
    %20 = vector.load %arg5[%c10, %c0_20, %c0_21] : memref<12x1x128xf32, #tpu.memory_space<vmem>>, vector<1x1x128xf32>
    %21 = vector.shape_cast %20 : vector<1x1x128xf32> to vector<1x128xf32>
    %c11 = arith.constant 11 : index
    %c0_22 = arith.constant 0 : index
    %c0_23 = arith.constant 0 : index
    %22 = vector.load %arg5[%c11, %c0_22, %c0_23] : memref<12x1x128xf32, #tpu.memory_space<vmem>>, vector<1x1x128xf32>
    %23 = vector.shape_cast %22 : vector<1x1x128xf32> to vector<1x128xf32>
    %c0_24 = arith.constant 0 : index
    %24 = memref.load %arg4[%c0_24] : memref<1xf32, #tpu.memory_space<smem>>
    %25 = vector.broadcast %24 : f32 to vector<1x128xf32>
    %c0_25 = arith.constant 0 : index
    %26 = memref.load %arg2[%c0_25] : memref<12xf32, #tpu.memory_space<smem>>
    %27 = vector.broadcast %26 : f32 to vector<1x128xf32>
    %c0_26 = arith.constant 0 : index
    %c0_27 = arith.constant 0 : index
    %28 = memref.load %arg1[%c0_26, %c0_27] : memref<12x12xf32, #tpu.memory_space<smem>>
    %29 = vector.broadcast %28 : f32 to vector<1x128xf32>
    %30 = arith.mulf %29, %1 : vector<1x128xf32>
    %31 = arith.addf %27, %30 : vector<1x128xf32>
    %c0_28 = arith.constant 0 : index
    %c1_29 = arith.constant 1 : index
    %32 = memref.load %arg1[%c0_28, %c1_29] : memref<12x12xf32, #tpu.memory_space<smem>>
    %33 = vector.broadcast %32 : f32 to vector<1x128xf32>
    %34 = arith.mulf %33, %3 : vector<1x128xf32>
    %35 = arith.addf %31, %34 : vector<1x128xf32>
    %c0_30 = arith.constant 0 : index
    %c2_31 = arith.constant 2 : index
    %36 = memref.load %arg1[%c0_30, %c2_31] : memref<12x12xf32, #tpu.memory_space<smem>>
    %37 = vector.broadcast %36 : f32 to vector<1x128xf32>
    %38 = arith.mulf %37, %5 : vector<1x128xf32>
    %39 = arith.addf %35, %38 : vector<1x128xf32>
    %c0_32 = arith.constant 0 : index
    %c3_33 = arith.constant 3 : index
    %40 = memref.load %arg1[%c0_32, %c3_33] : memref<12x12xf32, #tpu.memory_space<smem>>
    %41 = vector.broadcast %40 : f32 to vector<1x128xf32>
    %42 = arith.mulf %41, %7 : vector<1x128xf32>
    %43 = arith.addf %39, %42 : vector<1x128xf32>
    %c0_34 = arith.constant 0 : index
    %c4_35 = arith.constant 4 : index
    %44 = memref.load %arg1[%c0_34, %c4_35] : memref<12x12xf32, #tpu.memory_space<smem>>
    %45 = vector.broadcast %44 : f32 to vector<1x128xf32>
    %46 = arith.mulf %45, %9 : vector<1x128xf32>
    %47 = arith.addf %43, %46 : vector<1x128xf32>
    %c0_36 = arith.constant 0 : index
    %c5_37 = arith.constant 5 : index
    %48 = memref.load %arg1[%c0_36, %c5_37] : memref<12x12xf32, #tpu.memory_space<smem>>
    %49 = vector.broadcast %48 : f32 to vector<1x128xf32>
    %50 = arith.mulf %49, %11 : vector<1x128xf32>
    %51 = arith.addf %47, %50 : vector<1x128xf32>
    %c0_38 = arith.constant 0 : index
    %c6_39 = arith.constant 6 : index
    %52 = memref.load %arg1[%c0_38, %c6_39] : memref<12x12xf32, #tpu.memory_space<smem>>
    %53 = vector.broadcast %52 : f32 to vector<1x128xf32>
    %54 = arith.mulf %53, %13 : vector<1x128xf32>
    %55 = arith.addf %51, %54 : vector<1x128xf32>
    %c0_40 = arith.constant 0 : index
    %c7_41 = arith.constant 7 : index
    %56 = memref.load %arg1[%c0_40, %c7_41] : memref<12x12xf32, #tpu.memory_space<smem>>
    %57 = vector.broadcast %56 : f32 to vector<1x128xf32>
    %58 = arith.mulf %57, %15 : vector<1x128xf32>
    %59 = arith.addf %55, %58 : vector<1x128xf32>
    %c0_42 = arith.constant 0 : index
    %c8_43 = arith.constant 8 : index
    %60 = memref.load %arg1[%c0_42, %c8_43] : memref<12x12xf32, #tpu.memory_space<smem>>
    %61 = vector.broadcast %60 : f32 to vector<1x128xf32>
    %62 = arith.mulf %61, %17 : vector<1x128xf32>
    %63 = arith.addf %59, %62 : vector<1x128xf32>
    %c0_44 = arith.constant 0 : index
    %c9_45 = arith.constant 9 : index
    %64 = memref.load %arg1[%c0_44, %c9_45] : memref<12x12xf32, #tpu.memory_space<smem>>
    %65 = vector.broadcast %64 : f32 to vector<1x128xf32>
    %66 = arith.mulf %65, %19 : vector<1x128xf32>
    %67 = arith.addf %63, %66 : vector<1x128xf32>
    %c0_46 = arith.constant 0 : index
    %c10_47 = arith.constant 10 : index
    %68 = memref.load %arg1[%c0_46, %c10_47] : memref<12x12xf32, #tpu.memory_space<smem>>
    %69 = vector.broadcast %68 : f32 to vector<1x128xf32>
    %70 = arith.mulf %69, %21 : vector<1x128xf32>
    %71 = arith.addf %67, %70 : vector<1x128xf32>
    %c0_48 = arith.constant 0 : index
    %c11_49 = arith.constant 11 : index
    %72 = memref.load %arg1[%c0_48, %c11_49] : memref<12x12xf32, #tpu.memory_space<smem>>
    %73 = vector.broadcast %72 : f32 to vector<1x128xf32>
    %74 = arith.mulf %73, %23 : vector<1x128xf32>
    %75 = arith.addf %71, %74 : vector<1x128xf32>
    %cst = arith.constant 0.000000e+00 : f32
    %76 = vector.broadcast %cst : f32 to vector<1x128xf32>
    %77 = arith.maximumf %75, %76 : vector<1x128xf32>
    %c0_50 = arith.constant 0 : index
    %78 = memref.load %arg3[%c0_50] : memref<12xf32, #tpu.memory_space<smem>>
    %79 = vector.broadcast %78 : f32 to vector<1x128xf32>
    %80 = arith.mulf %79, %77 : vector<1x128xf32>
    %81 = arith.addf %25, %80 : vector<1x128xf32>
    %c1_51 = arith.constant 1 : index
    %82 = memref.load %arg2[%c1_51] : memref<12xf32, #tpu.memory_space<smem>>
    %83 = vector.broadcast %82 : f32 to vector<1x128xf32>
    %c1_52 = arith.constant 1 : index
    %c0_53 = arith.constant 0 : index
    %84 = memref.load %arg1[%c1_52, %c0_53] : memref<12x12xf32, #tpu.memory_space<smem>>
    %85 = vector.broadcast %84 : f32 to vector<1x128xf32>
    %86 = arith.mulf %85, %1 : vector<1x128xf32>
    %87 = arith.addf %83, %86 : vector<1x128xf32>
    %c1_54 = arith.constant 1 : index
    %c1_55 = arith.constant 1 : index
    %88 = memref.load %arg1[%c1_54, %c1_55] : memref<12x12xf32, #tpu.memory_space<smem>>
    %89 = vector.broadcast %88 : f32 to vector<1x128xf32>
    %90 = arith.mulf %89, %3 : vector<1x128xf32>
    %91 = arith.addf %87, %90 : vector<1x128xf32>
    %c1_56 = arith.constant 1 : index
    %c2_57 = arith.constant 2 : index
    %92 = memref.load %arg1[%c1_56, %c2_57] : memref<12x12xf32, #tpu.memory_space<smem>>
    %93 = vector.broadcast %92 : f32 to vector<1x128xf32>
    %94 = arith.mulf %93, %5 : vector<1x128xf32>
    %95 = arith.addf %91, %94 : vector<1x128xf32>
    %c1_58 = arith.constant 1 : index
    %c3_59 = arith.constant 3 : index
    %96 = memref.load %arg1[%c1_58, %c3_59] : memref<12x12xf32, #tpu.memory_space<smem>>
    %97 = vector.broadcast %96 : f32 to vector<1x128xf32>
    %98 = arith.mulf %97, %7 : vector<1x128xf32>
    %99 = arith.addf %95, %98 : vector<1x128xf32>
    %c1_60 = arith.constant 1 : index
    %c4_61 = arith.constant 4 : index
    %100 = memref.load %arg1[%c1_60, %c4_61] : memref<12x12xf32, #tpu.memory_space<smem>>
    %101 = vector.broadcast %100 : f32 to vector<1x128xf32>
    %102 = arith.mulf %101, %9 : vector<1x128xf32>
    %103 = arith.addf %99, %102 : vector<1x128xf32>
    %c1_62 = arith.constant 1 : index
    %c5_63 = arith.constant 5 : index
    %104 = memref.load %arg1[%c1_62, %c5_63] : memref<12x12xf32, #tpu.memory_space<smem>>
    %105 = vector.broadcast %104 : f32 to vector<1x128xf32>
    %106 = arith.mulf %105, %11 : vector<1x128xf32>
    %107 = arith.addf %103, %106 : vector<1x128xf32>
    %c1_64 = arith.constant 1 : index
    %c6_65 = arith.constant 6 : index
    %108 = memref.load %arg1[%c1_64, %c6_65] : memref<12x12xf32, #tpu.memory_space<smem>>
    %109 = vector.broadcast %108 : f32 to vector<1x128xf32>
    %110 = arith.mulf %109, %13 : vector<1x128xf32>
    %111 = arith.addf %107, %110 : vector<1x128xf32>
    %c1_66 = arith.constant 1 : index
    %c7_67 = arith.constant 7 : index
    %112 = memref.load %arg1[%c1_66, %c7_67] : memref<12x12xf32, #tpu.memory_space<smem>>
    %113 = vector.broadcast %112 : f32 to vector<1x128xf32>
    %114 = arith.mulf %113, %15 : vector<1x128xf32>
    %115 = arith.addf %111, %114 : vector<1x128xf32>
    %c1_68 = arith.constant 1 : index
    %c8_69 = arith.constant 8 : index
    %116 = memref.load %arg1[%c1_68, %c8_69] : memref<12x12xf32, #tpu.memory_space<smem>>
    %117 = vector.broadcast %116 : f32 to vector<1x128xf32>
    %118 = arith.mulf %117, %17 : vector<1x128xf32>
    %119 = arith.addf %115, %118 : vector<1x128xf32>
    %c1_70 = arith.constant 1 : index
    %c9_71 = arith.constant 9 : index
    %120 = memref.load %arg1[%c1_70, %c9_71] : memref<12x12xf32, #tpu.memory_space<smem>>
    %121 = vector.broadcast %120 : f32 to vector<1x128xf32>
    %122 = arith.mulf %121, %19 : vector<1x128xf32>
    %123 = arith.addf %119, %122 : vector<1x128xf32>
    %c1_72 = arith.constant 1 : index
    %c10_73 = arith.constant 10 : index
    %124 = memref.load %arg1[%c1_72, %c10_73] : memref<12x12xf32, #tpu.memory_space<smem>>
    %125 = vector.broadcast %124 : f32 to vector<1x128xf32>
    %126 = arith.mulf %125, %21 : vector<1x128xf32>
    %127 = arith.addf %123, %126 : vector<1x128xf32>
    %c1_74 = arith.constant 1 : index
    %c11_75 = arith.constant 11 : index
    %128 = memref.load %arg1[%c1_74, %c11_75] : memref<12x12xf32, #tpu.memory_space<smem>>
    %129 = vector.broadcast %128 : f32 to vector<1x128xf32>
    %130 = arith.mulf %129, %23 : vector<1x128xf32>
    %131 = arith.addf %127, %130 : vector<1x128xf32>
    %cst_76 = arith.constant 0.000000e+00 : f32
    %132 = vector.broadcast %cst_76 : f32 to vector<1x128xf32>
    %133 = arith.maximumf %131, %132 : vector<1x128xf32>
    %c1_77 = arith.constant 1 : index
    %134 = memref.load %arg3[%c1_77] : memref<12xf32, #tpu.memory_space<smem>>
    %135 = vector.broadcast %134 : f32 to vector<1x128xf32>
    %136 = arith.mulf %135, %133 : vector<1x128xf32>
    %137 = arith.addf %81, %136 : vector<1x128xf32>
    %c2_78 = arith.constant 2 : index
    %138 = memref.load %arg2[%c2_78] : memref<12xf32, #tpu.memory_space<smem>>
    %139 = vector.broadcast %138 : f32 to vector<1x128xf32>
    %c2_79 = arith.constant 2 : index
    %c0_80 = arith.constant 0 : index
    %140 = memref.load %arg1[%c2_79, %c0_80] : memref<12x12xf32, #tpu.memory_space<smem>>
    %141 = vector.broadcast %140 : f32 to vector<1x128xf32>
    %142 = arith.mulf %141, %1 : vector<1x128xf32>
    %143 = arith.addf %139, %142 : vector<1x128xf32>
    %c2_81 = arith.constant 2 : index
    %c1_82 = arith.constant 1 : index
    %144 = memref.load %arg1[%c2_81, %c1_82] : memref<12x12xf32, #tpu.memory_space<smem>>
    %145 = vector.broadcast %144 : f32 to vector<1x128xf32>
    %146 = arith.mulf %145, %3 : vector<1x128xf32>
    %147 = arith.addf %143, %146 : vector<1x128xf32>
    %c2_83 = arith.constant 2 : index
    %c2_84 = arith.constant 2 : index
    %148 = memref.load %arg1[%c2_83, %c2_84] : memref<12x12xf32, #tpu.memory_space<smem>>
    %149 = vector.broadcast %148 : f32 to vector<1x128xf32>
    %150 = arith.mulf %149, %5 : vector<1x128xf32>
    %151 = arith.addf %147, %150 : vector<1x128xf32>
    %c2_85 = arith.constant 2 : index
    %c3_86 = arith.constant 3 : index
    %152 = memref.load %arg1[%c2_85, %c3_86] : memref<12x12xf32, #tpu.memory_space<smem>>
    %153 = vector.broadcast %152 : f32 to vector<1x128xf32>
    %154 = arith.mulf %153, %7 : vector<1x128xf32>
    %155 = arith.addf %151, %154 : vector<1x128xf32>
    %c2_87 = arith.constant 2 : index
    %c4_88 = arith.constant 4 : index
    %156 = memref.load %arg1[%c2_87, %c4_88] : memref<12x12xf32, #tpu.memory_space<smem>>
    %157 = vector.broadcast %156 : f32 to vector<1x128xf32>
    %158 = arith.mulf %157, %9 : vector<1x128xf32>
    %159 = arith.addf %155, %158 : vector<1x128xf32>
    %c2_89 = arith.constant 2 : index
    %c5_90 = arith.constant 5 : index
    %160 = memref.load %arg1[%c2_89, %c5_90] : memref<12x12xf32, #tpu.memory_space<smem>>
    %161 = vector.broadcast %160 : f32 to vector<1x128xf32>
    %162 = arith.mulf %161, %11 : vector<1x128xf32>
    %163 = arith.addf %159, %162 : vector<1x128xf32>
    %c2_91 = arith.constant 2 : index
    %c6_92 = arith.constant 6 : index
    %164 = memref.load %arg1[%c2_91, %c6_92] : memref<12x12xf32, #tpu.memory_space<smem>>
    %165 = vector.broadcast %164 : f32 to vector<1x128xf32>
    %166 = arith.mulf %165, %13 : vector<1x128xf32>
    %167 = arith.addf %163, %166 : vector<1x128xf32>
    %c2_93 = arith.constant 2 : index
    %c7_94 = arith.constant 7 : index
    %168 = memref.load %arg1[%c2_93, %c7_94] : memref<12x12xf32, #tpu.memory_space<smem>>
    %169 = vector.broadcast %168 : f32 to vector<1x128xf32>
    %170 = arith.mulf %169, %15 : vector<1x128xf32>
    %171 = arith.addf %167, %170 : vector<1x128xf32>
    %c2_95 = arith.constant 2 : index
    %c8_96 = arith.constant 8 : index
    %172 = memref.load %arg1[%c2_95, %c8_96] : memref<12x12xf32, #tpu.memory_space<smem>>
    %173 = vector.broadcast %172 : f32 to vector<1x128xf32>
    %174 = arith.mulf %173, %17 : vector<1x128xf32>
    %175 = arith.addf %171, %174 : vector<1x128xf32>
    %c2_97 = arith.constant 2 : index
    %c9_98 = arith.constant 9 : index
    %176 = memref.load %arg1[%c2_97, %c9_98] : memref<12x12xf32, #tpu.memory_space<smem>>
    %177 = vector.broadcast %176 : f32 to vector<1x128xf32>
    %178 = arith.mulf %177, %19 : vector<1x128xf32>
    %179 = arith.addf %175, %178 : vector<1x128xf32>
    %c2_99 = arith.constant 2 : index
    %c10_100 = arith.constant 10 : index
    %180 = memref.load %arg1[%c2_99, %c10_100] : memref<12x12xf32, #tpu.memory_space<smem>>
    %181 = vector.broadcast %180 : f32 to vector<1x128xf32>
    %182 = arith.mulf %181, %21 : vector<1x128xf32>
    %183 = arith.addf %179, %182 : vector<1x128xf32>
    %c2_101 = arith.constant 2 : index
    %c11_102 = arith.constant 11 : index
    %184 = memref.load %arg1[%c2_101, %c11_102] : memref<12x12xf32, #tpu.memory_space<smem>>
    %185 = vector.broadcast %184 : f32 to vector<1x128xf32>
    %186 = arith.mulf %185, %23 : vector<1x128xf32>
    %187 = arith.addf %183, %186 : vector<1x128xf32>
    %cst_103 = arith.constant 0.000000e+00 : f32
    %188 = vector.broadcast %cst_103 : f32 to vector<1x128xf32>
    %189 = arith.maximumf %187, %188 : vector<1x128xf32>
    %c2_104 = arith.constant 2 : index
    %190 = memref.load %arg3[%c2_104] : memref<12xf32, #tpu.memory_space<smem>>
    %191 = vector.broadcast %190 : f32 to vector<1x128xf32>
    %192 = arith.mulf %191, %189 : vector<1x128xf32>
    %193 = arith.addf %137, %192 : vector<1x128xf32>
    %c3_105 = arith.constant 3 : index
    %194 = memref.load %arg2[%c3_105] : memref<12xf32, #tpu.memory_space<smem>>
    %195 = vector.broadcast %194 : f32 to vector<1x128xf32>
    %c3_106 = arith.constant 3 : index
    %c0_107 = arith.constant 0 : index
    %196 = memref.load %arg1[%c3_106, %c0_107] : memref<12x12xf32, #tpu.memory_space<smem>>
    %197 = vector.broadcast %196 : f32 to vector<1x128xf32>
    %198 = arith.mulf %197, %1 : vector<1x128xf32>
    %199 = arith.addf %195, %198 : vector<1x128xf32>
    %c3_108 = arith.constant 3 : index
    %c1_109 = arith.constant 1 : index
    %200 = memref.load %arg1[%c3_108, %c1_109] : memref<12x12xf32, #tpu.memory_space<smem>>
    %201 = vector.broadcast %200 : f32 to vector<1x128xf32>
    %202 = arith.mulf %201, %3 : vector<1x128xf32>
    %203 = arith.addf %199, %202 : vector<1x128xf32>
    %c3_110 = arith.constant 3 : index
    %c2_111 = arith.constant 2 : index
    %204 = memref.load %arg1[%c3_110, %c2_111] : memref<12x12xf32, #tpu.memory_space<smem>>
    %205 = vector.broadcast %204 : f32 to vector<1x128xf32>
    %206 = arith.mulf %205, %5 : vector<1x128xf32>
    %207 = arith.addf %203, %206 : vector<1x128xf32>
    %c3_112 = arith.constant 3 : index
    %c3_113 = arith.constant 3 : index
    %208 = memref.load %arg1[%c3_112, %c3_113] : memref<12x12xf32, #tpu.memory_space<smem>>
    %209 = vector.broadcast %208 : f32 to vector<1x128xf32>
    %210 = arith.mulf %209, %7 : vector<1x128xf32>
    %211 = arith.addf %207, %210 : vector<1x128xf32>
    %c3_114 = arith.constant 3 : index
    %c4_115 = arith.constant 4 : index
    %212 = memref.load %arg1[%c3_114, %c4_115] : memref<12x12xf32, #tpu.memory_space<smem>>
    %213 = vector.broadcast %212 : f32 to vector<1x128xf32>
    %214 = arith.mulf %213, %9 : vector<1x128xf32>
    %215 = arith.addf %211, %214 : vector<1x128xf32>
    %c3_116 = arith.constant 3 : index
    %c5_117 = arith.constant 5 : index
    %216 = memref.load %arg1[%c3_116, %c5_117] : memref<12x12xf32, #tpu.memory_space<smem>>
    %217 = vector.broadcast %216 : f32 to vector<1x128xf32>
    %218 = arith.mulf %217, %11 : vector<1x128xf32>
    %219 = arith.addf %215, %218 : vector<1x128xf32>
    %c3_118 = arith.constant 3 : index
    %c6_119 = arith.constant 6 : index
    %220 = memref.load %arg1[%c3_118, %c6_119] : memref<12x12xf32, #tpu.memory_space<smem>>
    %221 = vector.broadcast %220 : f32 to vector<1x128xf32>
    %222 = arith.mulf %221, %13 : vector<1x128xf32>
    %223 = arith.addf %219, %222 : vector<1x128xf32>
    %c3_120 = arith.constant 3 : index
    %c7_121 = arith.constant 7 : index
    %224 = memref.load %arg1[%c3_120, %c7_121] : memref<12x12xf32, #tpu.memory_space<smem>>
    %225 = vector.broadcast %224 : f32 to vector<1x128xf32>
    %226 = arith.mulf %225, %15 : vector<1x128xf32>
    %227 = arith.addf %223, %226 : vector<1x128xf32>
    %c3_122 = arith.constant 3 : index
    %c8_123 = arith.constant 8 : index
    %228 = memref.load %arg1[%c3_122, %c8_123] : memref<12x12xf32, #tpu.memory_space<smem>>
    %229 = vector.broadcast %228 : f32 to vector<1x128xf32>
    %230 = arith.mulf %229, %17 : vector<1x128xf32>
    %231 = arith.addf %227, %230 : vector<1x128xf32>
    %c3_124 = arith.constant 3 : index
    %c9_125 = arith.constant 9 : index
    %232 = memref.load %arg1[%c3_124, %c9_125] : memref<12x12xf32, #tpu.memory_space<smem>>
    %233 = vector.broadcast %232 : f32 to vector<1x128xf32>
    %234 = arith.mulf %233, %19 : vector<1x128xf32>
    %235 = arith.addf %231, %234 : vector<1x128xf32>
    %c3_126 = arith.constant 3 : index
    %c10_127 = arith.constant 10 : index
    %236 = memref.load %arg1[%c3_126, %c10_127] : memref<12x12xf32, #tpu.memory_space<smem>>
    %237 = vector.broadcast %236 : f32 to vector<1x128xf32>
    %238 = arith.mulf %237, %21 : vector<1x128xf32>
    %239 = arith.addf %235, %238 : vector<1x128xf32>
    %c3_128 = arith.constant 3 : index
    %c11_129 = arith.constant 11 : index
    %240 = memref.load %arg1[%c3_128, %c11_129] : memref<12x12xf32, #tpu.memory_space<smem>>
    %241 = vector.broadcast %240 : f32 to vector<1x128xf32>
    %242 = arith.mulf %241, %23 : vector<1x128xf32>
    %243 = arith.addf %239, %242 : vector<1x128xf32>
    %cst_130 = arith.constant 0.000000e+00 : f32
    %244 = vector.broadcast %cst_130 : f32 to vector<1x128xf32>
    %245 = arith.maximumf %243, %244 : vector<1x128xf32>
    %c3_131 = arith.constant 3 : index
    %246 = memref.load %arg3[%c3_131] : memref<12xf32, #tpu.memory_space<smem>>
    %247 = vector.broadcast %246 : f32 to vector<1x128xf32>
    %248 = arith.mulf %247, %245 : vector<1x128xf32>
    %249 = arith.addf %193, %248 : vector<1x128xf32>
    %c4_132 = arith.constant 4 : index
    %250 = memref.load %arg2[%c4_132] : memref<12xf32, #tpu.memory_space<smem>>
    %251 = vector.broadcast %250 : f32 to vector<1x128xf32>
    %c4_133 = arith.constant 4 : index
    %c0_134 = arith.constant 0 : index
    %252 = memref.load %arg1[%c4_133, %c0_134] : memref<12x12xf32, #tpu.memory_space<smem>>
    %253 = vector.broadcast %252 : f32 to vector<1x128xf32>
    %254 = arith.mulf %253, %1 : vector<1x128xf32>
    %255 = arith.addf %251, %254 : vector<1x128xf32>
    %c4_135 = arith.constant 4 : index
    %c1_136 = arith.constant 1 : index
    %256 = memref.load %arg1[%c4_135, %c1_136] : memref<12x12xf32, #tpu.memory_space<smem>>
    %257 = vector.broadcast %256 : f32 to vector<1x128xf32>
    %258 = arith.mulf %257, %3 : vector<1x128xf32>
    %259 = arith.addf %255, %258 : vector<1x128xf32>
    %c4_137 = arith.constant 4 : index
    %c2_138 = arith.constant 2 : index
    %260 = memref.load %arg1[%c4_137, %c2_138] : memref<12x12xf32, #tpu.memory_space<smem>>
    %261 = vector.broadcast %260 : f32 to vector<1x128xf32>
    %262 = arith.mulf %261, %5 : vector<1x128xf32>
    %263 = arith.addf %259, %262 : vector<1x128xf32>
    %c4_139 = arith.constant 4 : index
    %c3_140 = arith.constant 3 : index
    %264 = memref.load %arg1[%c4_139, %c3_140] : memref<12x12xf32, #tpu.memory_space<smem>>
    %265 = vector.broadcast %264 : f32 to vector<1x128xf32>
    %266 = arith.mulf %265, %7 : vector<1x128xf32>
    %267 = arith.addf %263, %266 : vector<1x128xf32>
    %c4_141 = arith.constant 4 : index
    %c4_142 = arith.constant 4 : index
    %268 = memref.load %arg1[%c4_141, %c4_142] : memref<12x12xf32, #tpu.memory_space<smem>>
    %269 = vector.broadcast %268 : f32 to vector<1x128xf32>
    %270 = arith.mulf %269, %9 : vector<1x128xf32>
    %271 = arith.addf %267, %270 : vector<1x128xf32>
    %c4_143 = arith.constant 4 : index
    %c5_144 = arith.constant 5 : index
    %272 = memref.load %arg1[%c4_143, %c5_144] : memref<12x12xf32, #tpu.memory_space<smem>>
    %273 = vector.broadcast %272 : f32 to vector<1x128xf32>
    %274 = arith.mulf %273, %11 : vector<1x128xf32>
    %275 = arith.addf %271, %274 : vector<1x128xf32>
    %c4_145 = arith.constant 4 : index
    %c6_146 = arith.constant 6 : index
    %276 = memref.load %arg1[%c4_145, %c6_146] : memref<12x12xf32, #tpu.memory_space<smem>>
    %277 = vector.broadcast %276 : f32 to vector<1x128xf32>
    %278 = arith.mulf %277, %13 : vector<1x128xf32>
    %279 = arith.addf %275, %278 : vector<1x128xf32>
    %c4_147 = arith.constant 4 : index
    %c7_148 = arith.constant 7 : index
    %280 = memref.load %arg1[%c4_147, %c7_148] : memref<12x12xf32, #tpu.memory_space<smem>>
    %281 = vector.broadcast %280 : f32 to vector<1x128xf32>
    %282 = arith.mulf %281, %15 : vector<1x128xf32>
    %283 = arith.addf %279, %282 : vector<1x128xf32>
    %c4_149 = arith.constant 4 : index
    %c8_150 = arith.constant 8 : index
    %284 = memref.load %arg1[%c4_149, %c8_150] : memref<12x12xf32, #tpu.memory_space<smem>>
    %285 = vector.broadcast %284 : f32 to vector<1x128xf32>
    %286 = arith.mulf %285, %17 : vector<1x128xf32>
    %287 = arith.addf %283, %286 : vector<1x128xf32>
    %c4_151 = arith.constant 4 : index
    %c9_152 = arith.constant 9 : index
    %288 = memref.load %arg1[%c4_151, %c9_152] : memref<12x12xf32, #tpu.memory_space<smem>>
    %289 = vector.broadcast %288 : f32 to vector<1x128xf32>
    %290 = arith.mulf %289, %19 : vector<1x128xf32>
    %291 = arith.addf %287, %290 : vector<1x128xf32>
    %c4_153 = arith.constant 4 : index
    %c10_154 = arith.constant 10 : index
    %292 = memref.load %arg1[%c4_153, %c10_154] : memref<12x12xf32, #tpu.memory_space<smem>>
    %293 = vector.broadcast %292 : f32 to vector<1x128xf32>
    %294 = arith.mulf %293, %21 : vector<1x128xf32>
    %295 = arith.addf %291, %294 : vector<1x128xf32>
    %c4_155 = arith.constant 4 : index
    %c11_156 = arith.constant 11 : index
    %296 = memref.load %arg1[%c4_155, %c11_156] : memref<12x12xf32, #tpu.memory_space<smem>>
    %297 = vector.broadcast %296 : f32 to vector<1x128xf32>
    %298 = arith.mulf %297, %23 : vector<1x128xf32>
    %299 = arith.addf %295, %298 : vector<1x128xf32>
    %cst_157 = arith.constant 0.000000e+00 : f32
    %300 = vector.broadcast %cst_157 : f32 to vector<1x128xf32>
    %301 = arith.maximumf %299, %300 : vector<1x128xf32>
    %c4_158 = arith.constant 4 : index
    %302 = memref.load %arg3[%c4_158] : memref<12xf32, #tpu.memory_space<smem>>
    %303 = vector.broadcast %302 : f32 to vector<1x128xf32>
    %304 = arith.mulf %303, %301 : vector<1x128xf32>
    %305 = arith.addf %249, %304 : vector<1x128xf32>
    %c5_159 = arith.constant 5 : index
    %306 = memref.load %arg2[%c5_159] : memref<12xf32, #tpu.memory_space<smem>>
    %307 = vector.broadcast %306 : f32 to vector<1x128xf32>
    %c5_160 = arith.constant 5 : index
    %c0_161 = arith.constant 0 : index
    %308 = memref.load %arg1[%c5_160, %c0_161] : memref<12x12xf32, #tpu.memory_space<smem>>
    %309 = vector.broadcast %308 : f32 to vector<1x128xf32>
    %310 = arith.mulf %309, %1 : vector<1x128xf32>
    %311 = arith.addf %307, %310 : vector<1x128xf32>
    %c5_162 = arith.constant 5 : index
    %c1_163 = arith.constant 1 : index
    %312 = memref.load %arg1[%c5_162, %c1_163] : memref<12x12xf32, #tpu.memory_space<smem>>
    %313 = vector.broadcast %312 : f32 to vector<1x128xf32>
    %314 = arith.mulf %313, %3 : vector<1x128xf32>
    %315 = arith.addf %311, %314 : vector<1x128xf32>
    %c5_164 = arith.constant 5 : index
    %c2_165 = arith.constant 2 : index
    %316 = memref.load %arg1[%c5_164, %c2_165] : memref<12x12xf32, #tpu.memory_space<smem>>
    %317 = vector.broadcast %316 : f32 to vector<1x128xf32>
    %318 = arith.mulf %317, %5 : vector<1x128xf32>
    %319 = arith.addf %315, %318 : vector<1x128xf32>
    %c5_166 = arith.constant 5 : index
    %c3_167 = arith.constant 3 : index
    %320 = memref.load %arg1[%c5_166, %c3_167] : memref<12x12xf32, #tpu.memory_space<smem>>
    %321 = vector.broadcast %320 : f32 to vector<1x128xf32>
    %322 = arith.mulf %321, %7 : vector<1x128xf32>
    %323 = arith.addf %319, %322 : vector<1x128xf32>
    %c5_168 = arith.constant 5 : index
    %c4_169 = arith.constant 4 : index
    %324 = memref.load %arg1[%c5_168, %c4_169] : memref<12x12xf32, #tpu.memory_space<smem>>
    %325 = vector.broadcast %324 : f32 to vector<1x128xf32>
    %326 = arith.mulf %325, %9 : vector<1x128xf32>
    %327 = arith.addf %323, %326 : vector<1x128xf32>
    %c5_170 = arith.constant 5 : index
    %c5_171 = arith.constant 5 : index
    %328 = memref.load %arg1[%c5_170, %c5_171] : memref<12x12xf32, #tpu.memory_space<smem>>
    %329 = vector.broadcast %328 : f32 to vector<1x128xf32>
    %330 = arith.mulf %329, %11 : vector<1x128xf32>
    %331 = arith.addf %327, %330 : vector<1x128xf32>
    %c5_172 = arith.constant 5 : index
    %c6_173 = arith.constant 6 : index
    %332 = memref.load %arg1[%c5_172, %c6_173] : memref<12x12xf32, #tpu.memory_space<smem>>
    %333 = vector.broadcast %332 : f32 to vector<1x128xf32>
    %334 = arith.mulf %333, %13 : vector<1x128xf32>
    %335 = arith.addf %331, %334 : vector<1x128xf32>
    %c5_174 = arith.constant 5 : index
    %c7_175 = arith.constant 7 : index
    %336 = memref.load %arg1[%c5_174, %c7_175] : memref<12x12xf32, #tpu.memory_space<smem>>
    %337 = vector.broadcast %336 : f32 to vector<1x128xf32>
    %338 = arith.mulf %337, %15 : vector<1x128xf32>
    %339 = arith.addf %335, %338 : vector<1x128xf32>
    %c5_176 = arith.constant 5 : index
    %c8_177 = arith.constant 8 : index
    %340 = memref.load %arg1[%c5_176, %c8_177] : memref<12x12xf32, #tpu.memory_space<smem>>
    %341 = vector.broadcast %340 : f32 to vector<1x128xf32>
    %342 = arith.mulf %341, %17 : vector<1x128xf32>
    %343 = arith.addf %339, %342 : vector<1x128xf32>
    %c5_178 = arith.constant 5 : index
    %c9_179 = arith.constant 9 : index
    %344 = memref.load %arg1[%c5_178, %c9_179] : memref<12x12xf32, #tpu.memory_space<smem>>
    %345 = vector.broadcast %344 : f32 to vector<1x128xf32>
    %346 = arith.mulf %345, %19 : vector<1x128xf32>
    %347 = arith.addf %343, %346 : vector<1x128xf32>
    %c5_180 = arith.constant 5 : index
    %c10_181 = arith.constant 10 : index
    %348 = memref.load %arg1[%c5_180, %c10_181] : memref<12x12xf32, #tpu.memory_space<smem>>
    %349 = vector.broadcast %348 : f32 to vector<1x128xf32>
    %350 = arith.mulf %349, %21 : vector<1x128xf32>
    %351 = arith.addf %347, %350 : vector<1x128xf32>
    %c5_182 = arith.constant 5 : index
    %c11_183 = arith.constant 11 : index
    %352 = memref.load %arg1[%c5_182, %c11_183] : memref<12x12xf32, #tpu.memory_space<smem>>
    %353 = vector.broadcast %352 : f32 to vector<1x128xf32>
    %354 = arith.mulf %353, %23 : vector<1x128xf32>
    %355 = arith.addf %351, %354 : vector<1x128xf32>
    %cst_184 = arith.constant 0.000000e+00 : f32
    %356 = vector.broadcast %cst_184 : f32 to vector<1x128xf32>
    %357 = arith.maximumf %355, %356 : vector<1x128xf32>
    %c5_185 = arith.constant 5 : index
    %358 = memref.load %arg3[%c5_185] : memref<12xf32, #tpu.memory_space<smem>>
    %359 = vector.broadcast %358 : f32 to vector<1x128xf32>
    %360 = arith.mulf %359, %357 : vector<1x128xf32>
    %361 = arith.addf %305, %360 : vector<1x128xf32>
    %c6_186 = arith.constant 6 : index
    %362 = memref.load %arg2[%c6_186] : memref<12xf32, #tpu.memory_space<smem>>
    %363 = vector.broadcast %362 : f32 to vector<1x128xf32>
    %c6_187 = arith.constant 6 : index
    %c0_188 = arith.constant 0 : index
    %364 = memref.load %arg1[%c6_187, %c0_188] : memref<12x12xf32, #tpu.memory_space<smem>>
    %365 = vector.broadcast %364 : f32 to vector<1x128xf32>
    %366 = arith.mulf %365, %1 : vector<1x128xf32>
    %367 = arith.addf %363, %366 : vector<1x128xf32>
    %c6_189 = arith.constant 6 : index
    %c1_190 = arith.constant 1 : index
    %368 = memref.load %arg1[%c6_189, %c1_190] : memref<12x12xf32, #tpu.memory_space<smem>>
    %369 = vector.broadcast %368 : f32 to vector<1x128xf32>
    %370 = arith.mulf %369, %3 : vector<1x128xf32>
    %371 = arith.addf %367, %370 : vector<1x128xf32>
    %c6_191 = arith.constant 6 : index
    %c2_192 = arith.constant 2 : index
    %372 = memref.load %arg1[%c6_191, %c2_192] : memref<12x12xf32, #tpu.memory_space<smem>>
    %373 = vector.broadcast %372 : f32 to vector<1x128xf32>
    %374 = arith.mulf %373, %5 : vector<1x128xf32>
    %375 = arith.addf %371, %374 : vector<1x128xf32>
    %c6_193 = arith.constant 6 : index
    %c3_194 = arith.constant 3 : index
    %376 = memref.load %arg1[%c6_193, %c3_194] : memref<12x12xf32, #tpu.memory_space<smem>>
    %377 = vector.broadcast %376 : f32 to vector<1x128xf32>
    %378 = arith.mulf %377, %7 : vector<1x128xf32>
    %379 = arith.addf %375, %378 : vector<1x128xf32>
    %c6_195 = arith.constant 6 : index
    %c4_196 = arith.constant 4 : index
    %380 = memref.load %arg1[%c6_195, %c4_196] : memref<12x12xf32, #tpu.memory_space<smem>>
    %381 = vector.broadcast %380 : f32 to vector<1x128xf32>
    %382 = arith.mulf %381, %9 : vector<1x128xf32>
    %383 = arith.addf %379, %382 : vector<1x128xf32>
    %c6_197 = arith.constant 6 : index
    %c5_198 = arith.constant 5 : index
    %384 = memref.load %arg1[%c6_197, %c5_198] : memref<12x12xf32, #tpu.memory_space<smem>>
    %385 = vector.broadcast %384 : f32 to vector<1x128xf32>
    %386 = arith.mulf %385, %11 : vector<1x128xf32>
    %387 = arith.addf %383, %386 : vector<1x128xf32>
    %c6_199 = arith.constant 6 : index
    %c6_200 = arith.constant 6 : index
    %388 = memref.load %arg1[%c6_199, %c6_200] : memref<12x12xf32, #tpu.memory_space<smem>>
    %389 = vector.broadcast %388 : f32 to vector<1x128xf32>
    %390 = arith.mulf %389, %13 : vector<1x128xf32>
    %391 = arith.addf %387, %390 : vector<1x128xf32>
    %c6_201 = arith.constant 6 : index
    %c7_202 = arith.constant 7 : index
    %392 = memref.load %arg1[%c6_201, %c7_202] : memref<12x12xf32, #tpu.memory_space<smem>>
    %393 = vector.broadcast %392 : f32 to vector<1x128xf32>
    %394 = arith.mulf %393, %15 : vector<1x128xf32>
    %395 = arith.addf %391, %394 : vector<1x128xf32>
    %c6_203 = arith.constant 6 : index
    %c8_204 = arith.constant 8 : index
    %396 = memref.load %arg1[%c6_203, %c8_204] : memref<12x12xf32, #tpu.memory_space<smem>>
    %397 = vector.broadcast %396 : f32 to vector<1x128xf32>
    %398 = arith.mulf %397, %17 : vector<1x128xf32>
    %399 = arith.addf %395, %398 : vector<1x128xf32>
    %c6_205 = arith.constant 6 : index
    %c9_206 = arith.constant 9 : index
    %400 = memref.load %arg1[%c6_205, %c9_206] : memref<12x12xf32, #tpu.memory_space<smem>>
    %401 = vector.broadcast %400 : f32 to vector<1x128xf32>
    %402 = arith.mulf %401, %19 : vector<1x128xf32>
    %403 = arith.addf %399, %402 : vector<1x128xf32>
    %c6_207 = arith.constant 6 : index
    %c10_208 = arith.constant 10 : index
    %404 = memref.load %arg1[%c6_207, %c10_208] : memref<12x12xf32, #tpu.memory_space<smem>>
    %405 = vector.broadcast %404 : f32 to vector<1x128xf32>
    %406 = arith.mulf %405, %21 : vector<1x128xf32>
    %407 = arith.addf %403, %406 : vector<1x128xf32>
    %c6_209 = arith.constant 6 : index
    %c11_210 = arith.constant 11 : index
    %408 = memref.load %arg1[%c6_209, %c11_210] : memref<12x12xf32, #tpu.memory_space<smem>>
    %409 = vector.broadcast %408 : f32 to vector<1x128xf32>
    %410 = arith.mulf %409, %23 : vector<1x128xf32>
    %411 = arith.addf %407, %410 : vector<1x128xf32>
    %cst_211 = arith.constant 0.000000e+00 : f32
    %412 = vector.broadcast %cst_211 : f32 to vector<1x128xf32>
    %413 = arith.maximumf %411, %412 : vector<1x128xf32>
    %c6_212 = arith.constant 6 : index
    %414 = memref.load %arg3[%c6_212] : memref<12xf32, #tpu.memory_space<smem>>
    %415 = vector.broadcast %414 : f32 to vector<1x128xf32>
    %416 = arith.mulf %415, %413 : vector<1x128xf32>
    %417 = arith.addf %361, %416 : vector<1x128xf32>
    %c7_213 = arith.constant 7 : index
    %418 = memref.load %arg2[%c7_213] : memref<12xf32, #tpu.memory_space<smem>>
    %419 = vector.broadcast %418 : f32 to vector<1x128xf32>
    %c7_214 = arith.constant 7 : index
    %c0_215 = arith.constant 0 : index
    %420 = memref.load %arg1[%c7_214, %c0_215] : memref<12x12xf32, #tpu.memory_space<smem>>
    %421 = vector.broadcast %420 : f32 to vector<1x128xf32>
    %422 = arith.mulf %421, %1 : vector<1x128xf32>
    %423 = arith.addf %419, %422 : vector<1x128xf32>
    %c7_216 = arith.constant 7 : index
    %c1_217 = arith.constant 1 : index
    %424 = memref.load %arg1[%c7_216, %c1_217] : memref<12x12xf32, #tpu.memory_space<smem>>
    %425 = vector.broadcast %424 : f32 to vector<1x128xf32>
    %426 = arith.mulf %425, %3 : vector<1x128xf32>
    %427 = arith.addf %423, %426 : vector<1x128xf32>
    %c7_218 = arith.constant 7 : index
    %c2_219 = arith.constant 2 : index
    %428 = memref.load %arg1[%c7_218, %c2_219] : memref<12x12xf32, #tpu.memory_space<smem>>
    %429 = vector.broadcast %428 : f32 to vector<1x128xf32>
    %430 = arith.mulf %429, %5 : vector<1x128xf32>
    %431 = arith.addf %427, %430 : vector<1x128xf32>
    %c7_220 = arith.constant 7 : index
    %c3_221 = arith.constant 3 : index
    %432 = memref.load %arg1[%c7_220, %c3_221] : memref<12x12xf32, #tpu.memory_space<smem>>
    %433 = vector.broadcast %432 : f32 to vector<1x128xf32>
    %434 = arith.mulf %433, %7 : vector<1x128xf32>
    %435 = arith.addf %431, %434 : vector<1x128xf32>
    %c7_222 = arith.constant 7 : index
    %c4_223 = arith.constant 4 : index
    %436 = memref.load %arg1[%c7_222, %c4_223] : memref<12x12xf32, #tpu.memory_space<smem>>
    %437 = vector.broadcast %436 : f32 to vector<1x128xf32>
    %438 = arith.mulf %437, %9 : vector<1x128xf32>
    %439 = arith.addf %435, %438 : vector<1x128xf32>
    %c7_224 = arith.constant 7 : index
    %c5_225 = arith.constant 5 : index
    %440 = memref.load %arg1[%c7_224, %c5_225] : memref<12x12xf32, #tpu.memory_space<smem>>
    %441 = vector.broadcast %440 : f32 to vector<1x128xf32>
    %442 = arith.mulf %441, %11 : vector<1x128xf32>
    %443 = arith.addf %439, %442 : vector<1x128xf32>
    %c7_226 = arith.constant 7 : index
    %c6_227 = arith.constant 6 : index
    %444 = memref.load %arg1[%c7_226, %c6_227] : memref<12x12xf32, #tpu.memory_space<smem>>
    %445 = vector.broadcast %444 : f32 to vector<1x128xf32>
    %446 = arith.mulf %445, %13 : vector<1x128xf32>
    %447 = arith.addf %443, %446 : vector<1x128xf32>
    %c7_228 = arith.constant 7 : index
    %c7_229 = arith.constant 7 : index
    %448 = memref.load %arg1[%c7_228, %c7_229] : memref<12x12xf32, #tpu.memory_space<smem>>
    %449 = vector.broadcast %448 : f32 to vector<1x128xf32>
    %450 = arith.mulf %449, %15 : vector<1x128xf32>
    %451 = arith.addf %447, %450 : vector<1x128xf32>
    %c7_230 = arith.constant 7 : index
    %c8_231 = arith.constant 8 : index
    %452 = memref.load %arg1[%c7_230, %c8_231] : memref<12x12xf32, #tpu.memory_space<smem>>
    %453 = vector.broadcast %452 : f32 to vector<1x128xf32>
    %454 = arith.mulf %453, %17 : vector<1x128xf32>
    %455 = arith.addf %451, %454 : vector<1x128xf32>
    %c7_232 = arith.constant 7 : index
    %c9_233 = arith.constant 9 : index
    %456 = memref.load %arg1[%c7_232, %c9_233] : memref<12x12xf32, #tpu.memory_space<smem>>
    %457 = vector.broadcast %456 : f32 to vector<1x128xf32>
    %458 = arith.mulf %457, %19 : vector<1x128xf32>
    %459 = arith.addf %455, %458 : vector<1x128xf32>
    %c7_234 = arith.constant 7 : index
    %c10_235 = arith.constant 10 : index
    %460 = memref.load %arg1[%c7_234, %c10_235] : memref<12x12xf32, #tpu.memory_space<smem>>
    %461 = vector.broadcast %460 : f32 to vector<1x128xf32>
    %462 = arith.mulf %461, %21 : vector<1x128xf32>
    %463 = arith.addf %459, %462 : vector<1x128xf32>
    %c7_236 = arith.constant 7 : index
    %c11_237 = arith.constant 11 : index
    %464 = memref.load %arg1[%c7_236, %c11_237] : memref<12x12xf32, #tpu.memory_space<smem>>
    %465 = vector.broadcast %464 : f32 to vector<1x128xf32>
    %466 = arith.mulf %465, %23 : vector<1x128xf32>
    %467 = arith.addf %463, %466 : vector<1x128xf32>
    %cst_238 = arith.constant 0.000000e+00 : f32
    %468 = vector.broadcast %cst_238 : f32 to vector<1x128xf32>
    %469 = arith.maximumf %467, %468 : vector<1x128xf32>
    %c7_239 = arith.constant 7 : index
    %470 = memref.load %arg3[%c7_239] : memref<12xf32, #tpu.memory_space<smem>>
    %471 = vector.broadcast %470 : f32 to vector<1x128xf32>
    %472 = arith.mulf %471, %469 : vector<1x128xf32>
    %473 = arith.addf %417, %472 : vector<1x128xf32>
    %c8_240 = arith.constant 8 : index
    %474 = memref.load %arg2[%c8_240] : memref<12xf32, #tpu.memory_space<smem>>
    %475 = vector.broadcast %474 : f32 to vector<1x128xf32>
    %c8_241 = arith.constant 8 : index
    %c0_242 = arith.constant 0 : index
    %476 = memref.load %arg1[%c8_241, %c0_242] : memref<12x12xf32, #tpu.memory_space<smem>>
    %477 = vector.broadcast %476 : f32 to vector<1x128xf32>
    %478 = arith.mulf %477, %1 : vector<1x128xf32>
    %479 = arith.addf %475, %478 : vector<1x128xf32>
    %c8_243 = arith.constant 8 : index
    %c1_244 = arith.constant 1 : index
    %480 = memref.load %arg1[%c8_243, %c1_244] : memref<12x12xf32, #tpu.memory_space<smem>>
    %481 = vector.broadcast %480 : f32 to vector<1x128xf32>
    %482 = arith.mulf %481, %3 : vector<1x128xf32>
    %483 = arith.addf %479, %482 : vector<1x128xf32>
    %c8_245 = arith.constant 8 : index
    %c2_246 = arith.constant 2 : index
    %484 = memref.load %arg1[%c8_245, %c2_246] : memref<12x12xf32, #tpu.memory_space<smem>>
    %485 = vector.broadcast %484 : f32 to vector<1x128xf32>
    %486 = arith.mulf %485, %5 : vector<1x128xf32>
    %487 = arith.addf %483, %486 : vector<1x128xf32>
    %c8_247 = arith.constant 8 : index
    %c3_248 = arith.constant 3 : index
    %488 = memref.load %arg1[%c8_247, %c3_248] : memref<12x12xf32, #tpu.memory_space<smem>>
    %489 = vector.broadcast %488 : f32 to vector<1x128xf32>
    %490 = arith.mulf %489, %7 : vector<1x128xf32>
    %491 = arith.addf %487, %490 : vector<1x128xf32>
    %c8_249 = arith.constant 8 : index
    %c4_250 = arith.constant 4 : index
    %492 = memref.load %arg1[%c8_249, %c4_250] : memref<12x12xf32, #tpu.memory_space<smem>>
    %493 = vector.broadcast %492 : f32 to vector<1x128xf32>
    %494 = arith.mulf %493, %9 : vector<1x128xf32>
    %495 = arith.addf %491, %494 : vector<1x128xf32>
    %c8_251 = arith.constant 8 : index
    %c5_252 = arith.constant 5 : index
    %496 = memref.load %arg1[%c8_251, %c5_252] : memref<12x12xf32, #tpu.memory_space<smem>>
    %497 = vector.broadcast %496 : f32 to vector<1x128xf32>
    %498 = arith.mulf %497, %11 : vector<1x128xf32>
    %499 = arith.addf %495, %498 : vector<1x128xf32>
    %c8_253 = arith.constant 8 : index
    %c6_254 = arith.constant 6 : index
    %500 = memref.load %arg1[%c8_253, %c6_254] : memref<12x12xf32, #tpu.memory_space<smem>>
    %501 = vector.broadcast %500 : f32 to vector<1x128xf32>
    %502 = arith.mulf %501, %13 : vector<1x128xf32>
    %503 = arith.addf %499, %502 : vector<1x128xf32>
    %c8_255 = arith.constant 8 : index
    %c7_256 = arith.constant 7 : index
    %504 = memref.load %arg1[%c8_255, %c7_256] : memref<12x12xf32, #tpu.memory_space<smem>>
    %505 = vector.broadcast %504 : f32 to vector<1x128xf32>
    %506 = arith.mulf %505, %15 : vector<1x128xf32>
    %507 = arith.addf %503, %506 : vector<1x128xf32>
    %c8_257 = arith.constant 8 : index
    %c8_258 = arith.constant 8 : index
    %508 = memref.load %arg1[%c8_257, %c8_258] : memref<12x12xf32, #tpu.memory_space<smem>>
    %509 = vector.broadcast %508 : f32 to vector<1x128xf32>
    %510 = arith.mulf %509, %17 : vector<1x128xf32>
    %511 = arith.addf %507, %510 : vector<1x128xf32>
    %c8_259 = arith.constant 8 : index
    %c9_260 = arith.constant 9 : index
    %512 = memref.load %arg1[%c8_259, %c9_260] : memref<12x12xf32, #tpu.memory_space<smem>>
    %513 = vector.broadcast %512 : f32 to vector<1x128xf32>
    %514 = arith.mulf %513, %19 : vector<1x128xf32>
    %515 = arith.addf %511, %514 : vector<1x128xf32>
    %c8_261 = arith.constant 8 : index
    %c10_262 = arith.constant 10 : index
    %516 = memref.load %arg1[%c8_261, %c10_262] : memref<12x12xf32, #tpu.memory_space<smem>>
    %517 = vector.broadcast %516 : f32 to vector<1x128xf32>
    %518 = arith.mulf %517, %21 : vector<1x128xf32>
    %519 = arith.addf %515, %518 : vector<1x128xf32>
    %c8_263 = arith.constant 8 : index
    %c11_264 = arith.constant 11 : index
    %520 = memref.load %arg1[%c8_263, %c11_264] : memref<12x12xf32, #tpu.memory_space<smem>>
    %521 = vector.broadcast %520 : f32 to vector<1x128xf32>
    %522 = arith.mulf %521, %23 : vector<1x128xf32>
    %523 = arith.addf %519, %522 : vector<1x128xf32>
    %cst_265 = arith.constant 0.000000e+00 : f32
    %524 = vector.broadcast %cst_265 : f32 to vector<1x128xf32>
    %525 = arith.maximumf %523, %524 : vector<1x128xf32>
    %c8_266 = arith.constant 8 : index
    %526 = memref.load %arg3[%c8_266] : memref<12xf32, #tpu.memory_space<smem>>
    %527 = vector.broadcast %526 : f32 to vector<1x128xf32>
    %528 = arith.mulf %527, %525 : vector<1x128xf32>
    %529 = arith.addf %473, %528 : vector<1x128xf32>
    %c9_267 = arith.constant 9 : index
    %530 = memref.load %arg2[%c9_267] : memref<12xf32, #tpu.memory_space<smem>>
    %531 = vector.broadcast %530 : f32 to vector<1x128xf32>
    %c9_268 = arith.constant 9 : index
    %c0_269 = arith.constant 0 : index
    %532 = memref.load %arg1[%c9_268, %c0_269] : memref<12x12xf32, #tpu.memory_space<smem>>
    %533 = vector.broadcast %532 : f32 to vector<1x128xf32>
    %534 = arith.mulf %533, %1 : vector<1x128xf32>
    %535 = arith.addf %531, %534 : vector<1x128xf32>
    %c9_270 = arith.constant 9 : index
    %c1_271 = arith.constant 1 : index
    %536 = memref.load %arg1[%c9_270, %c1_271] : memref<12x12xf32, #tpu.memory_space<smem>>
    %537 = vector.broadcast %536 : f32 to vector<1x128xf32>
    %538 = arith.mulf %537, %3 : vector<1x128xf32>
    %539 = arith.addf %535, %538 : vector<1x128xf32>
    %c9_272 = arith.constant 9 : index
    %c2_273 = arith.constant 2 : index
    %540 = memref.load %arg1[%c9_272, %c2_273] : memref<12x12xf32, #tpu.memory_space<smem>>
    %541 = vector.broadcast %540 : f32 to vector<1x128xf32>
    %542 = arith.mulf %541, %5 : vector<1x128xf32>
    %543 = arith.addf %539, %542 : vector<1x128xf32>
    %c9_274 = arith.constant 9 : index
    %c3_275 = arith.constant 3 : index
    %544 = memref.load %arg1[%c9_274, %c3_275] : memref<12x12xf32, #tpu.memory_space<smem>>
    %545 = vector.broadcast %544 : f32 to vector<1x128xf32>
    %546 = arith.mulf %545, %7 : vector<1x128xf32>
    %547 = arith.addf %543, %546 : vector<1x128xf32>
    %c9_276 = arith.constant 9 : index
    %c4_277 = arith.constant 4 : index
    %548 = memref.load %arg1[%c9_276, %c4_277] : memref<12x12xf32, #tpu.memory_space<smem>>
    %549 = vector.broadcast %548 : f32 to vector<1x128xf32>
    %550 = arith.mulf %549, %9 : vector<1x128xf32>
    %551 = arith.addf %547, %550 : vector<1x128xf32>
    %c9_278 = arith.constant 9 : index
    %c5_279 = arith.constant 5 : index
    %552 = memref.load %arg1[%c9_278, %c5_279] : memref<12x12xf32, #tpu.memory_space<smem>>
    %553 = vector.broadcast %552 : f32 to vector<1x128xf32>
    %554 = arith.mulf %553, %11 : vector<1x128xf32>
    %555 = arith.addf %551, %554 : vector<1x128xf32>
    %c9_280 = arith.constant 9 : index
    %c6_281 = arith.constant 6 : index
    %556 = memref.load %arg1[%c9_280, %c6_281] : memref<12x12xf32, #tpu.memory_space<smem>>
    %557 = vector.broadcast %556 : f32 to vector<1x128xf32>
    %558 = arith.mulf %557, %13 : vector<1x128xf32>
    %559 = arith.addf %555, %558 : vector<1x128xf32>
    %c9_282 = arith.constant 9 : index
    %c7_283 = arith.constant 7 : index
    %560 = memref.load %arg1[%c9_282, %c7_283] : memref<12x12xf32, #tpu.memory_space<smem>>
    %561 = vector.broadcast %560 : f32 to vector<1x128xf32>
    %562 = arith.mulf %561, %15 : vector<1x128xf32>
    %563 = arith.addf %559, %562 : vector<1x128xf32>
    %c9_284 = arith.constant 9 : index
    %c8_285 = arith.constant 8 : index
    %564 = memref.load %arg1[%c9_284, %c8_285] : memref<12x12xf32, #tpu.memory_space<smem>>
    %565 = vector.broadcast %564 : f32 to vector<1x128xf32>
    %566 = arith.mulf %565, %17 : vector<1x128xf32>
    %567 = arith.addf %563, %566 : vector<1x128xf32>
    %c9_286 = arith.constant 9 : index
    %c9_287 = arith.constant 9 : index
    %568 = memref.load %arg1[%c9_286, %c9_287] : memref<12x12xf32, #tpu.memory_space<smem>>
    %569 = vector.broadcast %568 : f32 to vector<1x128xf32>
    %570 = arith.mulf %569, %19 : vector<1x128xf32>
    %571 = arith.addf %567, %570 : vector<1x128xf32>
    %c9_288 = arith.constant 9 : index
    %c10_289 = arith.constant 10 : index
    %572 = memref.load %arg1[%c9_288, %c10_289] : memref<12x12xf32, #tpu.memory_space<smem>>
    %573 = vector.broadcast %572 : f32 to vector<1x128xf32>
    %574 = arith.mulf %573, %21 : vector<1x128xf32>
    %575 = arith.addf %571, %574 : vector<1x128xf32>
    %c9_290 = arith.constant 9 : index
    %c11_291 = arith.constant 11 : index
    %576 = memref.load %arg1[%c9_290, %c11_291] : memref<12x12xf32, #tpu.memory_space<smem>>
    %577 = vector.broadcast %576 : f32 to vector<1x128xf32>
    %578 = arith.mulf %577, %23 : vector<1x128xf32>
    %579 = arith.addf %575, %578 : vector<1x128xf32>
    %cst_292 = arith.constant 0.000000e+00 : f32
    %580 = vector.broadcast %cst_292 : f32 to vector<1x128xf32>
    %581 = arith.maximumf %579, %580 : vector<1x128xf32>
    %c9_293 = arith.constant 9 : index
    %582 = memref.load %arg3[%c9_293] : memref<12xf32, #tpu.memory_space<smem>>
    %583 = vector.broadcast %582 : f32 to vector<1x128xf32>
    %584 = arith.mulf %583, %581 : vector<1x128xf32>
    %585 = arith.addf %529, %584 : vector<1x128xf32>
    %c10_294 = arith.constant 10 : index
    %586 = memref.load %arg2[%c10_294] : memref<12xf32, #tpu.memory_space<smem>>
    %587 = vector.broadcast %586 : f32 to vector<1x128xf32>
    %c10_295 = arith.constant 10 : index
    %c0_296 = arith.constant 0 : index
    %588 = memref.load %arg1[%c10_295, %c0_296] : memref<12x12xf32, #tpu.memory_space<smem>>
    %589 = vector.broadcast %588 : f32 to vector<1x128xf32>
    %590 = arith.mulf %589, %1 : vector<1x128xf32>
    %591 = arith.addf %587, %590 : vector<1x128xf32>
    %c10_297 = arith.constant 10 : index
    %c1_298 = arith.constant 1 : index
    %592 = memref.load %arg1[%c10_297, %c1_298] : memref<12x12xf32, #tpu.memory_space<smem>>
    %593 = vector.broadcast %592 : f32 to vector<1x128xf32>
    %594 = arith.mulf %593, %3 : vector<1x128xf32>
    %595 = arith.addf %591, %594 : vector<1x128xf32>
    %c10_299 = arith.constant 10 : index
    %c2_300 = arith.constant 2 : index
    %596 = memref.load %arg1[%c10_299, %c2_300] : memref<12x12xf32, #tpu.memory_space<smem>>
    %597 = vector.broadcast %596 : f32 to vector<1x128xf32>
    %598 = arith.mulf %597, %5 : vector<1x128xf32>
    %599 = arith.addf %595, %598 : vector<1x128xf32>
    %c10_301 = arith.constant 10 : index
    %c3_302 = arith.constant 3 : index
    %600 = memref.load %arg1[%c10_301, %c3_302] : memref<12x12xf32, #tpu.memory_space<smem>>
    %601 = vector.broadcast %600 : f32 to vector<1x128xf32>
    %602 = arith.mulf %601, %7 : vector<1x128xf32>
    %603 = arith.addf %599, %602 : vector<1x128xf32>
    %c10_303 = arith.constant 10 : index
    %c4_304 = arith.constant 4 : index
    %604 = memref.load %arg1[%c10_303, %c4_304] : memref<12x12xf32, #tpu.memory_space<smem>>
    %605 = vector.broadcast %604 : f32 to vector<1x128xf32>
    %606 = arith.mulf %605, %9 : vector<1x128xf32>
    %607 = arith.addf %603, %606 : vector<1x128xf32>
    %c10_305 = arith.constant 10 : index
    %c5_306 = arith.constant 5 : index
    %608 = memref.load %arg1[%c10_305, %c5_306] : memref<12x12xf32, #tpu.memory_space<smem>>
    %609 = vector.broadcast %608 : f32 to vector<1x128xf32>
    %610 = arith.mulf %609, %11 : vector<1x128xf32>
    %611 = arith.addf %607, %610 : vector<1x128xf32>
    %c10_307 = arith.constant 10 : index
    %c6_308 = arith.constant 6 : index
    %612 = memref.load %arg1[%c10_307, %c6_308] : memref<12x12xf32, #tpu.memory_space<smem>>
    %613 = vector.broadcast %612 : f32 to vector<1x128xf32>
    %614 = arith.mulf %613, %13 : vector<1x128xf32>
    %615 = arith.addf %611, %614 : vector<1x128xf32>
    %c10_309 = arith.constant 10 : index
    %c7_310 = arith.constant 7 : index
    %616 = memref.load %arg1[%c10_309, %c7_310] : memref<12x12xf32, #tpu.memory_space<smem>>
    %617 = vector.broadcast %616 : f32 to vector<1x128xf32>
    %618 = arith.mulf %617, %15 : vector<1x128xf32>
    %619 = arith.addf %615, %618 : vector<1x128xf32>
    %c10_311 = arith.constant 10 : index
    %c8_312 = arith.constant 8 : index
    %620 = memref.load %arg1[%c10_311, %c8_312] : memref<12x12xf32, #tpu.memory_space<smem>>
    %621 = vector.broadcast %620 : f32 to vector<1x128xf32>
    %622 = arith.mulf %621, %17 : vector<1x128xf32>
    %623 = arith.addf %619, %622 : vector<1x128xf32>
    %c10_313 = arith.constant 10 : index
    %c9_314 = arith.constant 9 : index
    %624 = memref.load %arg1[%c10_313, %c9_314] : memref<12x12xf32, #tpu.memory_space<smem>>
    %625 = vector.broadcast %624 : f32 to vector<1x128xf32>
    %626 = arith.mulf %625, %19 : vector<1x128xf32>
    %627 = arith.addf %623, %626 : vector<1x128xf32>
    %c10_315 = arith.constant 10 : index
    %c10_316 = arith.constant 10 : index
    %628 = memref.load %arg1[%c10_315, %c10_316] : memref<12x12xf32, #tpu.memory_space<smem>>
    %629 = vector.broadcast %628 : f32 to vector<1x128xf32>
    %630 = arith.mulf %629, %21 : vector<1x128xf32>
    %631 = arith.addf %627, %630 : vector<1x128xf32>
    %c10_317 = arith.constant 10 : index
    %c11_318 = arith.constant 11 : index
    %632 = memref.load %arg1[%c10_317, %c11_318] : memref<12x12xf32, #tpu.memory_space<smem>>
    %633 = vector.broadcast %632 : f32 to vector<1x128xf32>
    %634 = arith.mulf %633, %23 : vector<1x128xf32>
    %635 = arith.addf %631, %634 : vector<1x128xf32>
    %cst_319 = arith.constant 0.000000e+00 : f32
    %636 = vector.broadcast %cst_319 : f32 to vector<1x128xf32>
    %637 = arith.maximumf %635, %636 : vector<1x128xf32>
    %c10_320 = arith.constant 10 : index
    %638 = memref.load %arg3[%c10_320] : memref<12xf32, #tpu.memory_space<smem>>
    %639 = vector.broadcast %638 : f32 to vector<1x128xf32>
    %640 = arith.mulf %639, %637 : vector<1x128xf32>
    %641 = arith.addf %585, %640 : vector<1x128xf32>
    %c11_321 = arith.constant 11 : index
    %642 = memref.load %arg2[%c11_321] : memref<12xf32, #tpu.memory_space<smem>>
    %643 = vector.broadcast %642 : f32 to vector<1x128xf32>
    %c11_322 = arith.constant 11 : index
    %c0_323 = arith.constant 0 : index
    %644 = memref.load %arg1[%c11_322, %c0_323] : memref<12x12xf32, #tpu.memory_space<smem>>
    %645 = vector.broadcast %644 : f32 to vector<1x128xf32>
    %646 = arith.mulf %645, %1 : vector<1x128xf32>
    %647 = arith.addf %643, %646 : vector<1x128xf32>
    %c11_324 = arith.constant 11 : index
    %c1_325 = arith.constant 1 : index
    %648 = memref.load %arg1[%c11_324, %c1_325] : memref<12x12xf32, #tpu.memory_space<smem>>
    %649 = vector.broadcast %648 : f32 to vector<1x128xf32>
    %650 = arith.mulf %649, %3 : vector<1x128xf32>
    %651 = arith.addf %647, %650 : vector<1x128xf32>
    %c11_326 = arith.constant 11 : index
    %c2_327 = arith.constant 2 : index
    %652 = memref.load %arg1[%c11_326, %c2_327] : memref<12x12xf32, #tpu.memory_space<smem>>
    %653 = vector.broadcast %652 : f32 to vector<1x128xf32>
    %654 = arith.mulf %653, %5 : vector<1x128xf32>
    %655 = arith.addf %651, %654 : vector<1x128xf32>
    %c11_328 = arith.constant 11 : index
    %c3_329 = arith.constant 3 : index
    %656 = memref.load %arg1[%c11_328, %c3_329] : memref<12x12xf32, #tpu.memory_space<smem>>
    %657 = vector.broadcast %656 : f32 to vector<1x128xf32>
    %658 = arith.mulf %657, %7 : vector<1x128xf32>
    %659 = arith.addf %655, %658 : vector<1x128xf32>
    %c11_330 = arith.constant 11 : index
    %c4_331 = arith.constant 4 : index
    %660 = memref.load %arg1[%c11_330, %c4_331] : memref<12x12xf32, #tpu.memory_space<smem>>
    %661 = vector.broadcast %660 : f32 to vector<1x128xf32>
    %662 = arith.mulf %661, %9 : vector<1x128xf32>
    %663 = arith.addf %659, %662 : vector<1x128xf32>
    %c11_332 = arith.constant 11 : index
    %c5_333 = arith.constant 5 : index
    %664 = memref.load %arg1[%c11_332, %c5_333] : memref<12x12xf32, #tpu.memory_space<smem>>
    %665 = vector.broadcast %664 : f32 to vector<1x128xf32>
    %666 = arith.mulf %665, %11 : vector<1x128xf32>
    %667 = arith.addf %663, %666 : vector<1x128xf32>
    %c11_334 = arith.constant 11 : index
    %c6_335 = arith.constant 6 : index
    %668 = memref.load %arg1[%c11_334, %c6_335] : memref<12x12xf32, #tpu.memory_space<smem>>
    %669 = vector.broadcast %668 : f32 to vector<1x128xf32>
    %670 = arith.mulf %669, %13 : vector<1x128xf32>
    %671 = arith.addf %667, %670 : vector<1x128xf32>
    %c11_336 = arith.constant 11 : index
    %c7_337 = arith.constant 7 : index
    %672 = memref.load %arg1[%c11_336, %c7_337] : memref<12x12xf32, #tpu.memory_space<smem>>
    %673 = vector.broadcast %672 : f32 to vector<1x128xf32>
    %674 = arith.mulf %673, %15 : vector<1x128xf32>
    %675 = arith.addf %671, %674 : vector<1x128xf32>
    %c11_338 = arith.constant 11 : index
    %c8_339 = arith.constant 8 : index
    %676 = memref.load %arg1[%c11_338, %c8_339] : memref<12x12xf32, #tpu.memory_space<smem>>
    %677 = vector.broadcast %676 : f32 to vector<1x128xf32>
    %678 = arith.mulf %677, %17 : vector<1x128xf32>
    %679 = arith.addf %675, %678 : vector<1x128xf32>
    %c11_340 = arith.constant 11 : index
    %c9_341 = arith.constant 9 : index
    %680 = memref.load %arg1[%c11_340, %c9_341] : memref<12x12xf32, #tpu.memory_space<smem>>
    %681 = vector.broadcast %680 : f32 to vector<1x128xf32>
    %682 = arith.mulf %681, %19 : vector<1x128xf32>
    %683 = arith.addf %679, %682 : vector<1x128xf32>
    %c11_342 = arith.constant 11 : index
    %c10_343 = arith.constant 10 : index
    %684 = memref.load %arg1[%c11_342, %c10_343] : memref<12x12xf32, #tpu.memory_space<smem>>
    %685 = vector.broadcast %684 : f32 to vector<1x128xf32>
    %686 = arith.mulf %685, %21 : vector<1x128xf32>
    %687 = arith.addf %683, %686 : vector<1x128xf32>
    %c11_344 = arith.constant 11 : index
    %c11_345 = arith.constant 11 : index
    %688 = memref.load %arg1[%c11_344, %c11_345] : memref<12x12xf32, #tpu.memory_space<smem>>
    %689 = vector.broadcast %688 : f32 to vector<1x128xf32>
    %690 = arith.mulf %689, %23 : vector<1x128xf32>
    %691 = arith.addf %687, %690 : vector<1x128xf32>
    %cst_346 = arith.constant 0.000000e+00 : f32
    %692 = vector.broadcast %cst_346 : f32 to vector<1x128xf32>
    %693 = arith.maximumf %691, %692 : vector<1x128xf32>
    %c11_347 = arith.constant 11 : index
    %694 = memref.load %arg3[%c11_347] : memref<12xf32, #tpu.memory_space<smem>>
    %695 = vector.broadcast %694 : f32 to vector<1x128xf32>
    %696 = arith.mulf %695, %693 : vector<1x128xf32>
    %697 = arith.addf %641, %696 : vector<1x128xf32>
    %698 = arith.negf %697 : vector<1x128xf32>
    %699 = math.exp %698 : vector<1x128xf32>
    %cst_348 = arith.constant 1.000000e+00 : f32
    %700 = vector.broadcast %cst_348 : f32 to vector<1x128xf32>
    %701 = arith.addf %700, %699 : vector<1x128xf32>
    %702 = arith.divf %700, %701 : vector<1x128xf32>
    %c0_349 = arith.constant 0 : index
    %c0_350 = arith.constant 0 : index
    %703 = vector.load %arg6[%c0_349, %c0_350] : memref<1x128xf32, #tpu.memory_space<vmem>>, vector<1x128xf32>
    tpu.vector_store %arg6[%c0_349, %c0_350], %702 {strides = array<i32>} : memref<1x128xf32, #tpu.memory_space<vmem>>, vector<1x128xf32>,
    return
  }
  func.func @transform_0(%arg0: i32) -> (i32, i32) {
    %c0_i32 = arith.constant 0 : i32
    %c0_i32_0 = arith.constant 0 : i32
    %c0_i32_1 = arith.constant 0 : i32
    return %c0_i32, %c0_i32_0 : i32, i32
  }
  func.func @transform_1(%arg0: i32) -> i32 {
    %c0_i32 = arith.constant 0 : i32
    %c0_i32_0 = arith.constant 0 : i32
    return %c0_i32 : i32
  }
  func.func @transform_2(%arg0: i32) -> i32 {
    %c0_i32 = arith.constant 0 : i32
    %c0_i32_0 = arith.constant 0 : i32
    return %c0_i32 : i32
  }
  func.func @transform_3(%arg0: i32) -> i32 {
    %c0_i32 = arith.constant 0 : i32
    %c0_i32_0 = arith.constant 0 : i32
    return %c0_i32 : i32
  }
  func.func @transform_4(%arg0: i32) -> (i32, i32, i32) {
    %c0_i32 = arith.constant 0 : i32
    %c0_i32_0 = arith.constant 0 : i32
    %c0_i32_1 = arith.constant 0 : i32
    return %c0_i32, %arg0, %c0_i32_0 : i32, i32, i32
  }
  func.func @transform_5(%arg0: i32) -> (i32, i32) {
    %c0_i32 = arith.constant 0 : i32
    %c0_i32_0 = arith.constant 0 : i32
    return %arg0, %c0_i32 : i32, i32
  }
}

</mosaic_0001>

<llo_original>
// kernel: fire_classifier.1
$region0: #{fire_classifier.1}
  #allocation0 [shape = 'u32[]', space=smem, size = 0x4, offset = 0x4, fixed_abs, tag = 'smem constant byte address 0x4 - core index']
  #allocation1 [shape = 'u32[144,128]{1,0:T(1,128)}', space=vmem, size = 0x12000, scoped, tag = 'internal scratch']
  #allocation2 [shape = 'f32[1]{0:T(128)S(6)}', space=smem, size = 0x200, scoped, tag = 'scoped memory for fire_classifier.1']
  %s0 = inlined_call_operand.vmem [shape: f32[12,12], index: 0, kind: input, shape index: {}]
  %s1 = inlined_call_operand.vmem [shape: f32[12], index: 1, kind: input, shape index: {}]
  %s2 = inlined_call_operand.vmem [shape: f32[12], index: 2, kind: input, shape index: {}]
  %s3 = inlined_call_operand.<no memory space> [shape: f32[1], index: 3, kind: input, shape index: {}]
  %s4 = inlined_call_operand.vmem [shape: f32[12,1,128], index: 4, kind: input, shape index: {}]
  %s5 = inlined_call_operand.vmem [shape: f32[1,128], index: 5, kind: output, shape index: {}]
  %s6 = sld [smem:[#allocation0]]
  $region42: #{fire_classifier.1} parent=0
    _
  %s8 = ssub.s32 1, %s6
  %s9 = scalar_select 0, %s8, %s6
  %10 = sst [smem:[#allocation2]] %s3
  $region1: #{fire_classifier.1} parent=0
    #allocation3 [shape = 'u8[8192]{0}', space=smem, size = 0x2000, scoped, tag = 'input window, operand 0, single buffered']
    #allocation4 [shape = 's32[1]{0}', space=sflag, size = 0x4, scoped, tag = 'scoped memory for fire_classifier.1']
    #allocation5 [shape = 'u8[512]{0}', space=smem, size = 0x200, scoped, tag = 'input window, operand 1, single buffered']
    #allocation6 [shape = 's32[1]{0}', space=sflag, size = 0x4, scoped, tag = 'scoped memory for fire_classifier.1']
    #allocation7 [shape = 'u8[512]{0}', space=smem, size = 0x200, scoped, tag = 'input window, operand 2, single buffered']
    %11 = vsyncpa [#allocation4], 0
    %12 = vsyncpa [#allocation6], 0
    // Predicated region
    $region2: #{fire_classifier.1} parent=1 // pred_check
      _
    $region3: #{fire_classifier.1} parent=1 // pred_check_branch
      %14 = sbr.rel (0) target = $region5
    $region4: #{fire_classifier.1} parent=1 // pred_region
      %s16 = ssub.s32 256, 256
      %17 = vsyncadd [#allocation4], %s16
      %s18 = sshll.u32 %s0, 4
      %s19 = int_to_ptr.vmem [resolvable:$true] %s18
      %24 = dma.vmem_to_smem %s19, 256, [#allocation3], [#allocation4], 128, 128, 8
    $region5: #{fire_classifier.1} parent=1 // pred_fallthru
      _
    // Predicated region
    $region6: #{fire_classifier.1} parent=1 // pred_check
      _
    $region7: #{fire_classifier.1} parent=1 // pred_check_branch
      %26 = sbr.rel (0) target = $region9
    $region8: #{fire_classifier.1} parent=1 // pred_region
      %s28 = ssub.s32 16, 16
      %29 = vsyncadd [#allocation6], %s28
      %s31 = sshll.u32 %s1, 4
      %s32 = int_to_ptr.vmem [resolvable:$true] %s31
      %34 = dma.vmem_to_smem %s32, 16, [#allocation5], [#allocation6]
    $region9: #{fire_classifier.1} parent=1 // pred_fallthru
      _
    // Predicated region
    $region10: #{fire_classifier.1} parent=1 // pred_check
      _
    $region11: #{fire_classifier.1} parent=1 // pred_check_branch
      %36 = sbr.rel (0) target = $region13
    $region12: #{fire_classifier.1} parent=1 // pred_region
      %s38 = ssub.s32 16, 16
      %39 = vsyncadd [#allocation6], %s38
      %s41 = sshll.u32 %s2, 4
      %s42 = int_to_ptr.vmem [resolvable:$true] %s41
      %44 = dma.vmem_to_smem %s42, 16, [#allocation7], [#allocation6]
    $region13: #{fire_classifier.1} parent=1 // pred_fallthru
      _
    // Predicated region
    $region14: #{fire_classifier.1} parent=1 // pred_check
      _
    $region15: #{fire_classifier.1} parent=1 // pred_check_branch
      %46 = sbr.rel (0) target = $region17
    $region16: #{fire_classifier.1} parent=1 // pred_region
      _
    $region17: #{fire_classifier.1} parent=1 // pred_fallthru
      _
    // Predicated region
    $region18: #{fire_classifier.1} parent=1 // pred_check
      _
    $region19: #{fire_classifier.1} parent=1 // pred_check_branch
      %48 = sbr.rel (0) target = $region21
    $region20: #{fire_classifier.1} parent=1 // pred_region
      _
    $region21: #{fire_classifier.1} parent=1 // pred_fallthru
      _
    // Predicated region
    $region22: #{fire_classifier.1} parent=1 // pred_check
      _
    $region23: #{fire_classifier.1} parent=1 // pred_check_branch
      %50 = sbr.rel (0) target = $region25
    $region24: #{fire_classifier.1} parent=1 // pred_region
      %51 = dma.done [#allocation4], 256
    $region25: #{fire_classifier.1} parent=1 // pred_fallthru
      _
    // Predicated region
    $region26: #{fire_classifier.1} parent=1 // pred_check
      _
    $region27: #{fire_classifier.1} parent=1 // pred_check_branch
      %53 = sbr.rel (0) target = $region29
    $region28: #{fire_classifier.1} parent=1 // pred_region
      %54 = dma.done [#allocation6], 16
    $region29: #{fire_classifier.1} parent=1 // pred_fallthru
      _
    // Predicated region
    $region30: #{fire_classifier.1} parent=1 // pred_check
      _
    $region31: #{fire_classifier.1} parent=1 // pred_check_branch
      %56 = sbr.rel (0) target = $region33
    $region32: #{fire_classifier.1} parent=1 // pred_region
      %57 = dma.done [#allocation6], 16
    $region33: #{fire_classifier.1} parent=1 // pred_fallthru
      _
    %58 = sfence
    %v59 = vld [vmem:[%s4] sm:$0x1]
    %s60 = scalar_lea.vmem %s4, 1
    %v61 = vld [vmem:[%s60] sm:$0x1]
    %s62 = scalar_lea.vmem %s4, 2
    %v63 = vld [vmem:[%s62] sm:$0x1]
    %s64 = scalar_lea.vmem %s4, 3
    %v65 = vld [vmem:[%s64] sm:$0x1]
    %s66 = scalar_lea.vmem %s4, 4
    %v67 = vld [vmem:[%s66] sm:$0x1]
    %s68 = scalar_lea.vmem %s4, 5
    %v69 = vld [vmem:[%s68] sm:$0x1]
    %s70 = scalar_lea.vmem %s4, 6
    %v71 = vld [vmem:[%s70] sm:$0x1]
    %s72 = scalar_lea.vmem %s4, 7
    %v73 = vld [vmem:[%s72] sm:$0x1]
    %s74 = scalar_lea.vmem %s4, 8
    %v75 = vld [vmem:[%s74] sm:$0x1]
    %s76 = scalar_lea.vmem %s4, 9
    %v77 = vld [vmem:[%s76] sm:$0x1]
    %s78 = scalar_lea.vmem %s4, 10
    %v79 = vld [vmem:[%s78] sm:$0x1]
    %s80 = scalar_lea.vmem %s4, 11
    %v81 = vld [vmem:[%s80] sm:$0x1]
    %s82 = sld [smem:[#allocation2]]
    %v83 = vstv %s82
    %s84 = sld [smem:[#allocation5]]
    %v85 = vstv %s84
    %s86 = sld [smem:[#allocation3]]
    %v87 = vstv %s86
    %v88 = vmul.f32 %v87, %v59
    %v89 = vadd.f32 %v85, %v88
    %s90 = sld [smem:[#allocation3 + $0x1]]
    %v91 = vstv %s90
    %v92 = vmul.f32 %v91, %v61
    %v93 = vadd.f32 %v89, %v92
    %s94 = sld [smem:[#allocation3 + $0x2]]
    %v95 = vstv %s94
    %v96 = vmul.f32 %v95, %v63
    %v97 = vadd.f32 %v93, %v96
    %s98 = sld [smem:[#allocation3 + $0x3]]
    %v99 = vstv %s98
    %v100 = vmul.f32 %v99, %v65
    %v101 = vadd.f32 %v97, %v100
    %s102 = sld [smem:[#allocation3 + $0x4]]
    %v103 = vstv %s102
    %v104 = vmul.f32 %v103, %v67
    %v105 = vadd.f32 %v101, %v104
    %s106 = sld [smem:[#allocation3 + $0x5]]
    %v107 = vstv %s106
    %v108 = vmul.f32 %v107, %v69
    %v109 = vadd.f32 %v105, %v108
    %s110 = sld [smem:[#allocation3 + $0x6]]
    %v111 = vstv %s110
    %v112 = vmul.f32 %v111, %v71
    %v113 = vadd.f32 %v109, %v112
    %s114 = sld [smem:[#allocation3 + $0x7]]
    %v115 = vstv %s114
    %v116 = vmul.f32 %v115, %v73
    %v117 = vadd.f32 %v113, %v116
    %s118 = sld [smem:[#allocation3 + $0x8]]
    %v119 = vstv %s118
    %v120 = vmul.f32 %v119, %v75
    %v121 = vadd.f32 %v117, %v120
    %s122 = sld [smem:[#allocation3 + $0x9]]
    %v123 = vstv %s122
    %v124 = vmul.f32 %v123, %v77
    %v125 = vadd.f32 %v121, %v124
    %s126 = sld [smem:[#allocation3 + $0xa]]
    %v127 = vstv %s126
    %v128 = vmul.f32 %v127, %v79
    %v129 = vadd.f32 %v125, %v128
    %s130 = sld [smem:[#allocation3 + $0xb]]
    %v131 = vstv %s130
    %v132 = vmul.f32 %v131, %v81
    %v133 = vadd.f32 %v129, %v132
    %v134 = vmax.f32 %v133, 0.0
    %s135 = sld [smem:[#allocation7]]
    %v136 = vstv %s135
    %v137 = vmul.f32 %v136, %v134
    %v138 = vadd.f32 %v83, %v137
    %s139 = sld [smem:[#allocation5 + $0x1]]
    %v140 = vstv %s139
    %s141 = sld [smem:[#allocation3 + $0x80]]
    %v142 = vstv %s141
    %v143 = vmul.f32 %v142, %v59
    %v144 = vadd.f32 %v140, %v143
    %s145 = sld [smem:[#allocation3 + $0x81]]
    %v146 = vstv %s145
    %v147 = vmul.f32 %v146, %v61
    %v148 = vadd.f32 %v144, %v147
    %s149 = sld [smem:[#allocation3 + $0x82]]
    %v150 = vstv %s149
    %v151 = vmul.f32 %v150, %v63
    %v152 = vadd.f32 %v148, %v151
    %s153 = sld [smem:[#allocation3 + $0x83]]
    %v154 = vstv %s153
    %v155 = vmul.f32 %v154, %v65
    %v156 = vadd.f32 %v152, %v155
    %s157 = sld [smem:[#allocation3 + $0x84]]
    %v158 = vstv %s157
    %v159 = vmul.f32 %v158, %v67
    %v160 = vadd.f32 %v156, %v159
    %s161 = sld [smem:[#allocation3 + $0x85]]
    %v162 = vstv %s161
    %v163 = vmul.f32 %v162, %v69
    %v164 = vadd.f32 %v160, %v163
    %s165 = sld [smem:[#allocation3 + $0x86]]
    %v166 = vstv %s165
    %v167 = vmul.f32 %v166, %v71
    %v168 = vadd.f32 %v164, %v167
    %s169 = sld [smem:[#allocation3 + $0x87]]
    %v170 = vstv %s169
    %v171 = vmul.f32 %v170, %v73
    %v172 = vadd.f32 %v168, %v171
    %s173 = sld [smem:[#allocation3 + $0x88]]
    %v174 = vstv %s173
    %v175 = vmul.f32 %v174, %v75
    %v176 = vadd.f32 %v172, %v175
    %s177 = sld [smem:[#allocation3 + $0x89]]
    %v178 = vstv %s177
    %v179 = vmul.f32 %v178, %v77
    %v180 = vadd.f32 %v176, %v179
    %s181 = sld [smem:[#allocation3 + $0x8a]]
    %v182 = vstv %s181
    %v183 = vmul.f32 %v182, %v79
    %v184 = vadd.f32 %v180, %v183
    %s185 = sld [smem:[#allocation3 + $0x8b]]
    %v186 = vstv %s185
    %v187 = vmul.f32 %v186, %v81
    %v188 = vadd.f32 %v184, %v187
    %v189 = vmax.f32 %v188, 0.0
    %s190 = sld [smem:[#allocation7 + $0x1]]
    %v191 = vstv %s190
    %v192 = vmul.f32 %v191, %v189
    %v193 = vadd.f32 %v138, %v192
    %s194 = sld [smem:[#allocation5 + $0x2]]
    %v195 = vstv %s194
    %s196 = sld [smem:[#allocation3 + $0x100]]
    %v197 = vstv %s196
    %v198 = vmul.f32 %v197, %v59
    %v199 = vadd.f32 %v195, %v198
    %s200 = sld [smem:[#allocation3 + $0x101]]
    %v201 = vstv %s200
    %v202 = vmul.f32 %v201, %v61
    %v203 = vadd.f32 %v199, %v202
    %s204 = sld [smem:[#allocation3 + $0x102]]
    %v205 = vstv %s204
    %v206 = vmul.f32 %v205, %v63
    %v207 = vadd.f32 %v203, %v206
    %s208 = sld [smem:[#allocation3 + $0x103]]
    %v209 = vstv %s208
    %v210 = vmul.f32 %v209, %v65
    %v211 = vadd.f32 %v207, %v210
    %s212 = sld [smem:[#allocation3 + $0x104]]
    %v213 = vstv %s212
    %v214 = vmul.f32 %v213, %v67
    %v215 = vadd.f32 %v211, %v214
    %s216 = sld [smem:[#allocation3 + $0x105]]
    %v217 = vstv %s216
    %v218 = vmul.f32 %v217, %v69
    %v219 = vadd.f32 %v215, %v218
    %s220 = sld [smem:[#allocation3 + $0x106]]
    %v221 = vstv %s220
    %v222 = vmul.f32 %v221, %v71
    %v223 = vadd.f32 %v219, %v222
    %s224 = sld [smem:[#allocation3 + $0x107]]
    %v225 = vstv %s224
    %v226 = vmul.f32 %v225, %v73
    %v227 = vadd.f32 %v223, %v226
    %s228 = sld [smem:[#allocation3 + $0x108]]
    %v229 = vstv %s228
    %v230 = vmul.f32 %v229, %v75
    %v231 = vadd.f32 %v227, %v230
    %s232 = sld [smem:[#allocation3 + $0x109]]
    %v233 = vstv %s232
    %v234 = vmul.f32 %v233, %v77
    %v235 = vadd.f32 %v231, %v234
    %s236 = sld [smem:[#allocation3 + $0x10a]]
    %v237 = vstv %s236
    %v238 = vmul.f32 %v237, %v79
    %v239 = vadd.f32 %v235, %v238
    %s240 = sld [smem:[#allocation3 + $0x10b]]
    %v241 = vstv %s240
    %v242 = vmul.f32 %v241, %v81
    %v243 = vadd.f32 %v239, %v242
    %v244 = vmax.f32 %v243, 0.0
    %s245 = sld [smem:[#allocation7 + $0x2]]
    %v246 = vstv %s245
    %v247 = vmul.f32 %v246, %v244
    %v248 = vadd.f32 %v193, %v247
    %s249 = sld [smem:[#allocation5 + $0x3]]
    %v250 = vstv %s249
    %s251 = sld [smem:[#allocation3 + $0x180]]
    %v252 = vstv %s251
    %v253 = vmul.f32 %v252, %v59
    %v254 = vadd.f32 %v250, %v253
    %s255 = sld [smem:[#allocation3 + $0x181]]
    %v256 = vstv %s255
    %v257 = vmul.f32 %v256, %v61
    %v258 = vadd.f32 %v254, %v257
    %s259 = sld [smem:[#allocation3 + $0x182]]
    %v260 = vstv %s259
    %v261 = vmul.f32 %v260, %v63
    %v262 = vadd.f32 %v258, %v261
    %s263 = sld [smem:[#allocation3 + $0x183]]
    %v264 = vstv %s263
    %v265 = vmul.f32 %v264, %v65
    %v266 = vadd.f32 %v262, %v265
    %s267 = sld [smem:[#allocation3 + $0x184]]
    %v268 = vstv %s267
    %v269 = vmul.f32 %v268, %v67
    %v270 = vadd.f32 %v266, %v269
    %s271 = sld [smem:[#allocation3 + $0x185]]
    %v272 = vstv %s271
    %v273 = vmul.f32 %v272, %v69
    %v274 = vadd.f32 %v270, %v273
    %s275 = sld [smem:[#allocation3 + $0x186]]
    %v276 = vstv %s275
    %v277 = vmul.f32 %v276, %v71
    %v278 = vadd.f32 %v274, %v277
    %s279 = sld [smem:[#allocation3 + $0x187]]
    %v280 = vstv %s279
    %v281 = vmul.f32 %v280, %v73
    %v282 = vadd.f32 %v278, %v281
    %s283 = sld [smem:[#allocation3 + $0x188]]
    %v284 = vstv %s283
    %v285 = vmul.f32 %v284, %v75
    %v286 = vadd.f32 %v282, %v285
    %s287 = sld [smem:[#allocation3 + $0x189]]
    %v288 = vstv %s287
    %v289 = vmul.f32 %v288, %v77
    %v290 = vadd.f32 %v286, %v289
    %s291 = sld [smem:[#allocation3 + $0x18a]]
    %v292 = vstv %s291
    %v293 = vmul.f32 %v292, %v79
    %v294 = vadd.f32 %v290, %v293
    %s295 = sld [smem:[#allocation3 + $0x18b]]
    %v296 = vstv %s295
    %v297 = vmul.f32 %v296, %v81
    %v298 = vadd.f32 %v294, %v297
    %v299 = vmax.f32 %v298, 0.0
    %s300 = sld [smem:[#allocation7 + $0x3]]
    %v301 = vstv %s300
    %v302 = vmul.f32 %v301, %v299
    %v303 = vadd.f32 %v248, %v302
    %s304 = sld [smem:[#allocation5 + $0x4]]
    %v305 = vstv %s304
    %s306 = sld [smem:[#allocation3 + $0x200]]
    %v307 = vstv %s306
    %v308 = vmul.f32 %v307, %v59
    %v309 = vadd.f32 %v305, %v308
    %s310 = sld [smem:[#allocation3 + $0x201]]
    %v311 = vstv %s310
    %v312 = vmul.f32 %v311, %v61
    %v313 = vadd.f32 %v309, %v312
    %s314 = sld [smem:[#allocation3 + $0x202]]
    %v315 = vstv %s314
    %v316 = vmul.f32 %v315, %v63
    %v317 = vadd.f32 %v313, %v316
    %s318 = sld [smem:[#allocation3 + $0x203]]
    %v319 = vstv %s318
    %v320 = vmul.f32 %v319, %v65
    %v321 = vadd.f32 %v317, %v320
    %s322 = sld [smem:[#allocation3 + $0x204]]
    %v323 = vstv %s322
    %v324 = vmul.f32 %v323, %v67
    %v325 = vadd.f32 %v321, %v324
    %s326 = sld [smem:[#allocation3 + $0x205]]
    %v327 = vstv %s326
    %v328 = vmul.f32 %v327, %v69
    %v329 = vadd.f32 %v325, %v328
    %s330 = sld [smem:[#allocation3 + $0x206]]
    %v331 = vstv %s330
    %v332 = vmul.f32 %v331, %v71
    %v333 = vadd.f32 %v329, %v332
    %s334 = sld [smem:[#allocation3 + $0x207]]
    %v335 = vstv %s334
    %v336 = vmul.f32 %v335, %v73
    %v337 = vadd.f32 %v333, %v336
    %s338 = sld [smem:[#allocation3 + $0x208]]
    %v339 = vstv %s338
    %v340 = vmul.f32 %v339, %v75
    %v341 = vadd.f32 %v337, %v340
    %s342 = sld [smem:[#allocation3 + $0x209]]
    %v343 = vstv %s342
    %v344 = vmul.f32 %v343, %v77
    %v345 = vadd.f32 %v341, %v344
    %s346 = sld [smem:[#allocation3 + $0x20a]]
    %v347 = vstv %s346
    %v348 = vmul.f32 %v347, %v79
    %v349 = vadd.f32 %v345, %v348
    %s350 = sld [smem:[#allocation3 + $0x20b]]
    %v351 = vstv %s350
    %v352 = vmul.f32 %v351, %v81
    %v353 = vadd.f32 %v349, %v352
    %v354 = vmax.f32 %v353, 0.0
    %s355 = sld [smem:[#allocation7 + $0x4]]
    %v356 = vstv %s355
    %v357 = vmul.f32 %v356, %v354
    %v358 = vadd.f32 %v303, %v357
    %s359 = sld [smem:[#allocation5 + $0x5]]
    %v360 = vstv %s359
    %s361 = sld [smem:[#allocation3 + $0x280]]
    %v362 = vstv %s361
    %v363 = vmul.f32 %v362, %v59
    %v364 = vadd.f32 %v360, %v363
    %s365 = sld [smem:[#allocation3 + $0x281]]
    %v366 = vstv %s365
    %v367 = vmul.f32 %v366, %v61
    %v368 = vadd.f32 %v364, %v367
    %s369 = sld [smem:[#allocation3 + $0x282]]
    %v370 = vstv %s369
    %v371 = vmul.f32 %v370, %v63
    %v372 = vadd.f32 %v368, %v371
    %s373 = sld [smem:[#allocation3 + $0x283]]
    %v374 = vstv %s373
    %v375 = vmul.f32 %v374, %v65
    %v376 = vadd.f32 %v372, %v375
    %s377 = sld [smem:[#allocation3 + $0x284]]
    %v378 = vstv %s377
    %v379 = vmul.f32 %v378, %v67
    %v380 = vadd.f32 %v376, %v379
    %s381 = sld [smem:[#allocation3 + $0x285]]
    %v382 = vstv %s381
    %v383 = vmul.f32 %v382, %v69
    %v384 = vadd.f32 %v380, %v383
    %s385 = sld [smem:[#allocation3 + $0x286]]
    %v386 = vstv %s385
    %v387 = vmul.f32 %v386, %v71
    %v388 = vadd.f32 %v384, %v387
    %s389 = sld [smem:[#allocation3 + $0x287]]
    %v390 = vstv %s389
    %v391 = vmul.f32 %v390, %v73
    %v392 = vadd.f32 %v388, %v391
    %s393 = sld [smem:[#allocation3 + $0x288]]
    %v394 = vstv %s393
    %v395 = vmul.f32 %v394, %v75
    %v396 = vadd.f32 %v392, %v395
    %s397 = sld [smem:[#allocation3 + $0x289]]
    %v398 = vstv %s397
    %v399 = vmul.f32 %v398, %v77
    %v400 = vadd.f32 %v396, %v399
    %s401 = sld [smem:[#allocation3 + $0x28a]]
    %v402 = vstv %s401
    %v403 = vmul.f32 %v402, %v79
    %v404 = vadd.f32 %v400, %v403
    %s405 = sld [smem:[#allocation3 + $0x28b]]
    %v406 = vstv %s405
    %v407 = vmul.f32 %v406, %v81
    %v408 = vadd.f32 %v404, %v407
    %v409 = vmax.f32 %v408, 0.0
    %s410 = sld [smem:[#allocation7 + $0x5]]
    %v411 = vstv %s410
    %v412 = vmul.f32 %v411, %v409
    %v413 = vadd.f32 %v358, %v412
    %s414 = sld [smem:[#allocation5 + $0x6]]
    %v415 = vstv %s414
    %s416 = sld [smem:[#allocation3 + $0x300]]
    %v417 = vstv %s416
    %v418 = vmul.f32 %v417, %v59
    %v419 = vadd.f32 %v415, %v418
    %s420 = sld [smem:[#allocation3 + $0x301]]
    %v421 = vstv %s420
    %v422 = vmul.f32 %v421, %v61
    %v423 = vadd.f32 %v419, %v422
    %s424 = sld [smem:[#allocation3 + $0x302]]
    %v425 = vstv %s424
    %v426 = vmul.f32 %v425, %v63
    %v427 = vadd.f32 %v423, %v426
    %s428 = sld [smem:[#allocation3 + $0x303]]
    %v429 = vstv %s428
    %v430 = vmul.f32 %v429, %v65
    %v431 = vadd.f32 %v427, %v430
    %s432 = sld [smem:[#allocation3 + $0x304]]
    %v433 = vstv %s432
    %v434 = vmul.f32 %v433, %v67
    %v435 = vadd.f32 %v431, %v434
    %s436 = sld [smem:[#allocation3 + $0x305]]
    %v437 = vstv %s436
    %v438 = vmul.f32 %v437, %v69
    %v439 = vadd.f32 %v435, %v438
    %s440 = sld [smem:[#allocation3 + $0x306]]
    %v441 = vstv %s440
    %v442 = vmul.f32 %v441, %v71
    %v443 = vadd.f32 %v439, %v442
    %s444 = sld [smem:[#allocation3 + $0x307]]
    %v445 = vstv %s444
    %v446 = vmul.f32 %v445, %v73
    %v447 = vadd.f32 %v443, %v446
    %s448 = sld [smem:[#allocation3 + $0x308]]
    %v449 = vstv %s448
    %v450 = vmul.f32 %v449, %v75
    %v451 = vadd.f32 %v447, %v450
    %s452 = sld [smem:[#allocation3 + $0x309]]
    %v453 = vstv %s452
    %v454 = vmul.f32 %v453, %v77
    %v455 = vadd.f32 %v451, %v454
    %s456 = sld [smem:[#allocation3 + $0x30a]]
    %v457 = vstv %s456
    %v458 = vmul.f32 %v457, %v79
    %v459 = vadd.f32 %v455, %v458
    %s460 = sld [smem:[#allocation3 + $0x30b]]
    %v461 = vstv %s460
    %v462 = vmul.f32 %v461, %v81
    %v463 = vadd.f32 %v459, %v462
    %v464 = vmax.f32 %v463, 0.0
    %s465 = sld [smem:[#allocation7 + $0x6]]
    %v466 = vstv %s465
    %v467 = vmul.f32 %v466, %v464
    %v468 = vadd.f32 %v413, %v467
    %s469 = sld [smem:[#allocation5 + $0x7]]
    %v470 = vstv %s469
    %s471 = sld [smem:[#allocation3 + $0x380]]
    %v472 = vstv %s471
    %v473 = vmul.f32 %v472, %v59
    %v474 = vadd.f32 %v470, %v473
    %s475 = sld [smem:[#allocation3 + $0x381]]
    %v476 = vstv %s475
    %v477 = vmul.f32 %v476, %v61
    %v478 = vadd.f32 %v474, %v477
    %s479 = sld [smem:[#allocation3 + $0x382]]
    %v480 = vstv %s479
    %v481 = vmul.f32 %v480, %v63
    %v482 = vadd.f32 %v478, %v481
    %s483 = sld [smem:[#allocation3 + $0x383]]
    %v484 = vstv %s483
    %v485 = vmul.f32 %v484, %v65
    %v486 = vadd.f32 %v482, %v485
    %s487 = sld [smem:[#allocation3 + $0x384]]
    %v488 = vstv %s487
    %v489 = vmul.f32 %v488, %v67
    %v490 = vadd.f32 %v486, %v489
    %s491 = sld [smem:[#allocation3 + $0x385]]
    %v492 = vstv %s491
    %v493 = vmul.f32 %v492, %v69
    %v494 = vadd.f32 %v490, %v493
    %s495 = sld [smem:[#allocation3 + $0x386]]
    %v496 = vstv %s495
    %v497 = vmul.f32 %v496, %v71
    %v498 = vadd.f32 %v494, %v497
    %s499 = sld [smem:[#allocation3 + $0x387]]
    %v500 = vstv %s499
    %v501 = vmul.f32 %v500, %v73
    %v502 = vadd.f32 %v498, %v501
    %s503 = sld [smem:[#allocation3 + $0x388]]
    %v504 = vstv %s503
    %v505 = vmul.f32 %v504, %v75
    %v506 = vadd.f32 %v502, %v505
    %s507 = sld [smem:[#allocation3 + $0x389]]
    %v508 = vstv %s507
    %v509 = vmul.f32 %v508, %v77
    %v510 = vadd.f32 %v506, %v509
    %s511 = sld [smem:[#allocation3 + $0x38a]]
    %v512 = vstv %s511
    %v513 = vmul.f32 %v512, %v79
    %v514 = vadd.f32 %v510, %v513
    %s515 = sld [smem:[#allocation3 + $0x38b]]
    %v516 = vstv %s515
    %v517 = vmul.f32 %v516, %v81
    %v518 = vadd.f32 %v514, %v517
    %v519 = vmax.f32 %v518, 0.0
    %s520 = sld [smem:[#allocation7 + $0x7]]
    %v521 = vstv %s520
    %v522 = vmul.f32 %v521, %v519
    %v523 = vadd.f32 %v468, %v522
    %s524 = sld [smem:[#allocation5 + $0x8]]
    %v525 = vstv %s524
    %s526 = sld [smem:[#allocation3 + $0x400]]
    %v527 = vstv %s526
    %v528 = vmul.f32 %v527, %v59
    %v529 = vadd.f32 %v525, %v528
    %s530 = sld [smem:[#allocation3 + $0x401]]
    %v531 = vstv %s530
    %v532 = vmul.f32 %v531, %v61
    %v533 = vadd.f32 %v529, %v532
    %s534 = sld [smem:[#allocation3 + $0x402]]
    %v535 = vstv %s534
    %v536 = vmul.f32 %v535, %v63
    %v537 = vadd.f32 %v533, %v536
    %s538 = sld [smem:[#allocation3 + $0x403]]
    %v539 = vstv %s538
    %v540 = vmul.f32 %v539, %v65
    %v541 = vadd.f32 %v537, %v540
    %s542 = sld [smem:[#allocation3 + $0x404]]
    %v543 = vstv %s542
    %v544 = vmul.f32 %v543, %v67
    %v545 = vadd.f32 %v541, %v544
    %s546 = sld [smem:[#allocation3 + $0x405]]
    %v547 = vstv %s546
    %v548 = vmul.f32 %v547, %v69
    %v549 = vadd.f32 %v545, %v548
    %s550 = sld [smem:[#allocation3 + $0x406]]
    %v551 = vstv %s550
    %v552 = vmul.f32 %v551, %v71
    %v553 = vadd.f32 %v549, %v552
    %s554 = sld [smem:[#allocation3 + $0x407]]
    %v555 = vstv %s554
    %v556 = vmul.f32 %v555, %v73
    %v557 = vadd.f32 %v553, %v556
    %s558 = sld [smem:[#allocation3 + $0x408]]
    %v559 = vstv %s558
    %v560 = vmul.f32 %v559, %v75
    %v561 = vadd.f32 %v557, %v560
    %s562 = sld [smem:[#allocation3 + $0x409]]
    %v563 = vstv %s562
    %v564 = vmul.f32 %v563, %v77
    %v565 = vadd.f32 %v561, %v564
    %s566 = sld [smem:[#allocation3 + $0x40a]]
    %v567 = vstv %s566
    %v568 = vmul.f32 %v567, %v79
    %v569 = vadd.f32 %v565, %v568
    %s570 = sld [smem:[#allocation3 + $0x40b]]
    %v571 = vstv %s570
    %v572 = vmul.f32 %v571, %v81
    %v573 = vadd.f32 %v569, %v572
    %v574 = vmax.f32 %v573, 0.0
    %s575 = sld [smem:[#allocation7 + $0x8]]
    %v576 = vstv %s575
    %v577 = vmul.f32 %v576, %v574
    %v578 = vadd.f32 %v523, %v577
    %s579 = sld [smem:[#allocation5 + $0x9]]
    %v580 = vstv %s579
    %s581 = sld [smem:[#allocation3 + $0x480]]
    %v582 = vstv %s581
    %v583 = vmul.f32 %v582, %v59
    %v584 = vadd.f32 %v580, %v583
    %s585 = sld [smem:[#allocation3 + $0x481]]
    %v586 = vstv %s585
    %v587 = vmul.f32 %v586, %v61
    %v588 = vadd.f32 %v584, %v587
    %s589 = sld [smem:[#allocation3 + $0x482]]
    %v590 = vstv %s589
    %v591 = vmul.f32 %v590, %v63
    %v592 = vadd.f32 %v588, %v591
    %s593 = sld [smem:[#allocation3 + $0x483]]
    %v594 = vstv %s593
    %v595 = vmul.f32 %v594, %v65
    %v596 = vadd.f32 %v592, %v595
    %s597 = sld [smem:[#allocation3 + $0x484]]
    %v598 = vstv %s597
    %v599 = vmul.f32 %v598, %v67
    %v600 = vadd.f32 %v596, %v599
    %s601 = sld [smem:[#allocation3 + $0x485]]
    %v602 = vstv %s601
    %v603 = vmul.f32 %v602, %v69
    %v604 = vadd.f32 %v600, %v603
    %s605 = sld [smem:[#allocation3 + $0x486]]
    %v606 = vstv %s605
    %v607 = vmul.f32 %v606, %v71
    %v608 = vadd.f32 %v604, %v607
    %s609 = sld [smem:[#allocation3 + $0x487]]
    %v610 = vstv %s609
    %v611 = vmul.f32 %v610, %v73
    %v612 = vadd.f32 %v608, %v611
    %s613 = sld [smem:[#allocation3 + $0x488]]
    %v614 = vstv %s613
    %v615 = vmul.f32 %v614, %v75
    %v616 = vadd.f32 %v612, %v615
    %s617 = sld [smem:[#allocation3 + $0x489]]
    %v618 = vstv %s617
    %v619 = vmul.f32 %v618, %v77
    %v620 = vadd.f32 %v616, %v619
    %s621 = sld [smem:[#allocation3 + $0x48a]]
    %v622 = vstv %s621
    %v623 = vmul.f32 %v622, %v79
    %v624 = vadd.f32 %v620, %v623
    %s625 = sld [smem:[#allocation3 + $0x48b]]
    %v626 = vstv %s625
    %v627 = vmul.f32 %v626, %v81
    %v628 = vadd.f32 %v624, %v627
    %v629 = vmax.f32 %v628, 0.0
    %s630 = sld [smem:[#allocation7 + $0x9]]
    %v631 = vstv %s630
    %v632 = vmul.f32 %v631, %v629
    %v633 = vadd.f32 %v578, %v632
    %s634 = sld [smem:[#allocation5 + $0xa]]
    %v635 = vstv %s634
    %s636 = sld [smem:[#allocation3 + $0x500]]
    %v637 = vstv %s636
    %v638 = vmul.f32 %v637, %v59
    %v639 = vadd.f32 %v635, %v638
    %s640 = sld [smem:[#allocation3 + $0x501]]
    %v641 = vstv %s640
    %v642 = vmul.f32 %v641, %v61
    %v643 = vadd.f32 %v639, %v642
    %s644 = sld [smem:[#allocation3 + $0x502]]
    %v645 = vstv %s644
    %v646 = vmul.f32 %v645, %v63
    %v647 = vadd.f32 %v643, %v646
    %s648 = sld [smem:[#allocation3 + $0x503]]
    %v649 = vstv %s648
    %v650 = vmul.f32 %v649, %v65
    %v651 = vadd.f32 %v647, %v650
    %s652 = sld [smem:[#allocation3 + $0x504]]
    %v653 = vstv %s652
    %v654 = vmul.f32 %v653, %v67
    %v655 = vadd.f32 %v651, %v654
    %s656 = sld [smem:[#allocation3 + $0x505]]
    %v657 = vstv %s656
    %v658 = vmul.f32 %v657, %v69
    %v659 = vadd.f32 %v655, %v658
    %s660 = sld [smem:[#allocation3 + $0x506]]
    %v661 = vstv %s660
    %v662 = vmul.f32 %v661, %v71
    %v663 = vadd.f32 %v659, %v662
    %s664 = sld [smem:[#allocation3 + $0x507]]
    %v665 = vstv %s664
    %v666 = vmul.f32 %v665, %v73
    %v667 = vadd.f32 %v663, %v666
    %s668 = sld [smem:[#allocation3 + $0x508]]
    %v669 = vstv %s668
    %v670 = vmul.f32 %v669, %v75
    %v671 = vadd.f32 %v667, %v670
    %s672 = sld [smem:[#allocation3 + $0x509]]
    %v673 = vstv %s672
    %v674 = vmul.f32 %v673, %v77
    %v675 = vadd.f32 %v671, %v674
    %s676 = sld [smem:[#allocation3 + $0x50a]]
    %v677 = vstv %s676
    %v678 = vmul.f32 %v677, %v79
    %v679 = vadd.f32 %v675, %v678
    %s680 = sld [smem:[#allocation3 + $0x50b]]
    %v681 = vstv %s680
    %v682 = vmul.f32 %v681, %v81
    %v683 = vadd.f32 %v679, %v682
    %v684 = vmax.f32 %v683, 0.0
    %s685 = sld [smem:[#allocation7 + $0xa]]
    %v686 = vstv %s685
    %v687 = vmul.f32 %v686, %v684
    %v688 = vadd.f32 %v633, %v687
    %s689 = sld [smem:[#allocation5 + $0xb]]
    %v690 = vstv %s689
    %s691 = sld [smem:[#allocation3 + $0x580]]
    %v692 = vstv %s691
    %v693 = vmul.f32 %v692, %v59
    %v694 = vadd.f32 %v690, %v693
    %s695 = sld [smem:[#allocation3 + $0x581]]
    %v696 = vstv %s695
    %v697 = vmul.f32 %v696, %v61
    %v698 = vadd.f32 %v694, %v697
    %s699 = sld [smem:[#allocation3 + $0x582]]
    %v700 = vstv %s699
    %v701 = vmul.f32 %v700, %v63
    %v702 = vadd.f32 %v698, %v701
    %s703 = sld [smem:[#allocation3 + $0x583]]
    %v704 = vstv %s703
    %v705 = vmul.f32 %v704, %v65
    %v706 = vadd.f32 %v702, %v705
    %s707 = sld [smem:[#allocation3 + $0x584]]
    %v708 = vstv %s707
    %v709 = vmul.f32 %v708, %v67
    %v710 = vadd.f32 %v706, %v709
    %s711 = sld [smem:[#allocation3 + $0x585]]
    %v712 = vstv %s711
    %v713 = vmul.f32 %v712, %v69
    %v714 = vadd.f32 %v710, %v713
    %s715 = sld [smem:[#allocation3 + $0x586]]
    %v716 = vstv %s715
    %v717 = vmul.f32 %v716, %v71
    %v718 = vadd.f32 %v714, %v717
    %s719 = sld [smem:[#allocation3 + $0x587]]
    %v720 = vstv %s719
    %v721 = vmul.f32 %v720, %v73
    %v722 = vadd.f32 %v718, %v721
    %s723 = sld [smem:[#allocation3 + $0x588]]
    %v724 = vstv %s723
    %v725 = vmul.f32 %v724, %v75
    %v726 = vadd.f32 %v722, %v725
    %s727 = sld [smem:[#allocation3 + $0x589]]
    %v728 = vstv %s727
    %v729 = vmul.f32 %v728, %v77
    %v730 = vadd.f32 %v726, %v729
    %s731 = sld [smem:[#allocation3 + $0x58a]]
    %v732 = vstv %s731
    %v733 = vmul.f32 %v732, %v79
    %v734 = vadd.f32 %v730, %v733
    %s735 = sld [smem:[#allocation3 + $0x58b]]
    %v736 = vstv %s735
    %v737 = vmul.f32 %v736, %v81
    %v738 = vadd.f32 %v734, %v737
    %v739 = vmax.f32 %v738, 0.0
    %s740 = sld [smem:[#allocation7 + $0xb]]
    %v741 = vstv %s740
    %v742 = vmul.f32 %v741, %v739
    %v743 = vadd.f32 %v688, %v742
    %v744 = vxor.u32 %v743, 2147483648
    %v745 = vmul.f32 %v744, 1.442695
    %v746 = vpow.pop %v745
    %v747 = vadd.f32 %v746, 1.0
    %v748 = vrcp.pop %v747
    %v749 = vmul.f32 1.0, %v748
    %750 = vst [vmem:[%s5] sm:$0x1] %v749
    // Predicated region
    $region34: #{fire_classifier.1} parent=1 // pred_check
      _
    $region35: #{fire_classifier.1} parent=1 // pred_check_branch
      %752 = sbr.rel (0) target = $region37
    $region36: #{fire_classifier.1} parent=1 // pred_region
      _
    $region37: #{fire_classifier.1} parent=1 // pred_fallthru
      _
    // Predicated region
    $region38: #{fire_classifier.1} parent=1 // pred_check
      _
    $region39: #{fire_classifier.1} parent=1 // pred_check_branch
      %754 = sbr.rel (0) target = $region41
    $region40: #{fire_classifier.1} parent=1 // pred_region
      _
    $region41: #{fire_classifier.1} parent=1 // pred_fallthru
      _
    %755 = vsyncpa [#allocation4], 1
    %756 = vsyncpa [#allocation6], 1

</llo_original>
